<compile_context>
chip_gen: v7x
topology: tpu7x:2x2x1
jax: 0.10.0
libtpu: 0.0.40
codegen_flags: <defaults>
</compile_context>

<pallas_src>
import jax
import jax.numpy as jnp
from jax.experimental import pallas as pl
from jax.experimental.pallas import tpu as pltpu


def _round_up(x, m):
    return (x + m - 1) // m * m


def _pad2(a, rows, cols):
    return jnp.zeros((rows, cols), a.dtype).at[:a.shape[0], :a.shape[1]].set(a)


def _pad1(b, n):
    return jnp.zeros((n,), b.dtype).at[:b.shape[0]].set(b)


def _pad_gates_w(w, H, Hp):
    # (H, 4H) -> (Hp, 4*Hp), each gate block starting at a 128-lane boundary
    out = jnp.zeros((Hp, 4 * Hp), w.dtype)
    for g in range(4):
        out = out.at[:H, g * Hp:g * Hp + H].set(w[:, g * H:(g + 1) * H])
    return out


def _pad_gates_b(b, H, Hp):
    out = jnp.zeros((4 * Hp,), b.dtype)
    for g in range(4):
        out = out.at[g * Hp:g * Hp + H].set(b[g * H:(g + 1) * H])
    return out


# ---------------------------------------------------------------------------
# Pallas kernel: fused decode loop.  One grid step == one decoder step
# (attention softmax, attn-apply, combine+relu, LSTM cell, out + log-softmax).
# Weights stay VMEM-resident across the grid; h/c carried in scratch.
# ---------------------------------------------------------------------------
def make_attn_decoder_kernel(H, V, L, Hp, Vp, Lp):
    Gp = 4 * Hp
    # --- packed weight-slab column offsets (all 128-lane aligned) ----------
    OFF_AE = 0                    # attn columns acting on `embedded`
    OFF_CE = OFF_AE + Lp          # attn_combine columns acting on `embedded`
    OFF_AH = OFF_CE + Hp          # attn columns acting on `hidden`
    OFF_HH = OFF_AH + Lp          # LSTM hidden-hidden gates (i,f,g,o)
    PROJ_W = OFF_HH + Gp          # width of the fused [emb; h] projection
    OFF_CA = PROJ_W               # attn_combine columns acting on attn_applied
    OFF_IH = OFF_CA + Hp          # LSTM input-hidden gates
    OFF_OUT = OFF_IH + Gp         # output projection
    # --- bias-slab offsets ---------------------------------------------------
    BOFF_A = 0
    BOFF_C = BOFF_A + Lp
    BOFF_G = BOFF_C + Hp
    BOFF_O = BOFF_G + Gp
    # --- merged output-slab column offsets ----------------------------------
    OUT_LP = 0                    # log-probs (Vp)
    OUT_H = OUT_LP + Vp           # new hidden state (Hp)
    OUT_C = OUT_H + Hp            # new cell state (Hp)
    OUT_AW = OUT_C + Hp           # attention weights (Lp)

    def kernel(emb_ref, h0c0_ref, enc_ref, w_ref, b_ref, out_ref,
               state_sc, enc_comb_sc):
        f32, bf16 = jnp.float32, jnp.bfloat16
        t = pl.program_id(0)

        # -- once per sequence: seed the h/c carry, hoist enc @ W_comb_a ------
        @pl.when(t == 0)
        def _():
            state_sc[...] = h0c0_ref[...]
            enc_comb_sc[...] = jnp.dot(
                enc_ref[...], w_ref[:, OFF_CA:OFF_CA + Hp],
                preferred_element_type=f32).astype(bf16)

        emb = emb_ref[pl.ds(t, 1), :]                 # (1, Hp) f32
        h = state_sc[0:1, :]                          # (1, Hp) f32
        c = state_sc[1:2, :]                          # (1, Hp) f32

        # -- ONE fused 2-row MXU push:
        #    [emb; h] @ [W_attn_e | W_comb_e | W_attn_h | W_hh]
        lhs = jnp.concatenate([emb, h], axis=0).astype(bf16)     # (2, Hp)
        proj = jnp.dot(lhs, w_ref[:, :PROJ_W], preferred_element_type=f32)

        # -- attn_weights = softmax(attn(cat(embedded, hidden))) --------------
        attn_logits = (proj[0:1, OFF_AE:OFF_AE + Lp]
                       + proj[1:2, OFF_AH:OFF_AH + Lp]
                       + b_ref[:, BOFF_A:BOFF_A + Lp])            # (1, Lp)
        if L < Lp:
            lane_l = jax.lax.broadcasted_iota(jnp.int32, (1, Lp), 1)
            attn_logits = jnp.where(lane_l < L, attn_logits, -jnp.inf)
        m = jnp.max(attn_logits, axis=1, keepdims=True)
        e = jnp.exp(attn_logits - m)
        attn_w = e / jnp.sum(e, axis=1, keepdims=True)    # exact reciprocal
        out_ref[pl.ds(t, 1), OUT_AW:OUT_AW + Lp] = attn_w

        # -- x = relu(attn_combine(cat(embedded, attn_applied)))
        #    attn_applied @ W_comb_a == attn_w @ (enc @ W_comb_a)  (hoisted)
        combined = (proj[0:1, OFF_CE:OFF_CE + Hp]
                    + jnp.dot(attn_w.astype(bf16), enc_comb_sc[...],
                              preferred_element_type=f32)
                    + b_ref[:, BOFF_C:BOFF_C + Hp])               # (1, Hp)
        x = jnp.maximum(combined, 0.0)

        # -- single-step LSTM cell (gate blocks 128-lane aligned) -------------
        gates = (proj[1:2, OFF_HH:OFF_HH + Gp]
                 + jnp.dot(x.astype(bf16), w_ref[:, OFF_IH:OFF_IH + Gp],
                           preferred_element_type=f32)
                 + b_ref[:, BOFF_G:BOFF_G + Gp])                  # (1, 4*Hp)
        i_g = jax.nn.sigmoid(gates[:, 0 * Hp:1 * Hp])
        f_g = jax.nn.sigmoid(gates[:, 1 * Hp:2 * Hp])
        g_g = jnp.tanh(gates[:, 2 * Hp:3 * Hp])
        o_g = jax.nn.sigmoid(gates[:, 3 * Hp:4 * Hp])
        c_new = f_g * c + i_g * g_g
        h_new = o_g * jnp.tanh(c_new)
        state_sc[0:1, :] = h_new                      # carry to next grid step
        state_sc[1:2, :] = c_new
        out_ref[pl.ds(t, 1), OUT_H:OUT_H + Hp] = h_new
        out_ref[pl.ds(t, 1), OUT_C:OUT_C + Hp] = c_new

        # -- log_softmax(out(h_new)) -------------------------------------------
        logits = (jnp.dot(h_new.astype(bf16), w_ref[:, OFF_OUT:OFF_OUT + Vp],
                          preferred_element_type=f32)
                  + b_ref[:, BOFF_O:BOFF_O + Vp])                 # (1, Vp)
        if V < Vp:
            lane_v = jax.lax.broadcasted_iota(jnp.int32, (1, Vp), 1)
            logits = jnp.where(lane_v < V, logits, -jnp.inf)
        m2 = jnp.max(logits, axis=1, keepdims=True)
        shifted = logits - m2
        lse = jnp.log(jnp.sum(jnp.exp(shifted), axis=1, keepdims=True))
        logp = shifted - lse
        if V < Vp:
            logp = jnp.where(lane_v < V, logp, 0.0)   # keep padded lanes finite
        out_ref[pl.ds(t, 1), OUT_LP:OUT_LP + Vp] = logp

    return kernel


# ---------------------------------------------------------------------------
# Python wrapper (parameter container + pallas_call glue)
# ---------------------------------------------------------------------------
class AttnDecoderRNNPallas:
    def __init__(self, hidden_size, output_size, max_length, key):
        self.hidden_size = H = hidden_size
        self.output_size = V = output_size
        self.max_length = L = max_length
        self.Hp = Hp = _round_up(H, 128)
        self.Vp = Vp = _round_up(V, 128)
        self.Lp = Lp = _round_up(L, 128)

        ks = jax.random.split(key, 10)
        s = 0.1
        f32 = jnp.float32
        # raw (unpadded, f32) parameters — weights stored transposed (in, out)
        self.embedding = jax.random.normal(ks[0], (V, H), f32) * s
        self.w_attn_e = jax.random.normal(ks[1], (H, L), f32) * s   # attn | emb part
        self.w_attn_h = jax.random.normal(ks[2], (H, L), f32) * s   # attn | hidden part
        self.b_attn = jax.random.normal(ks[3], (L,), f32) * s
        self.w_comb_e = jax.random.normal(ks[4], (H, H), f32) * s   # combine | emb part
        self.w_comb_a = jax.random.normal(ks[5], (H, H), f32) * s   # combine | attn part
        self.b_comb = jax.random.normal(ks[6], (H,), f32) * s
        self.w_ih = jax.random.normal(ks[7], (H, 4 * H), f32) * s   # LSTM gates i,f,g,o
        self.w_hh = jax.random.normal(ks[8], (H, 4 * H), f32) * s
        self.b_lstm = jnp.zeros((4 * H,), f32)                       # b_ih + b_hh
        self.w_out = jax.random.normal(ks[9], (H, V), f32) * s
        self.b_out = jnp.zeros((V,), f32)

        # packed, lane-padded slabs consumed by the kernel
        # column order MUST match make_attn_decoder_kernel's offsets
        self.w_slab = jnp.concatenate([
            _pad2(self.w_attn_e, Hp, Lp),        # OFF_AE
            _pad2(self.w_comb_e, Hp, Hp),        # OFF_CE
            _pad2(self.w_attn_h, Hp, Lp),        # OFF_AH
            _pad_gates_w(self.w_hh, H, Hp),      # OFF_HH
            _pad2(self.w_comb_a, Hp, Hp),        # OFF_CA
            _pad_gates_w(self.w_ih, H, Hp),      # OFF_IH
            _pad2(self.w_out, Hp, Vp),           # OFF_OUT
        ], axis=1).astype(jnp.bfloat16)          # (Hp, 2*Lp + 2*Hp + 8*Hp + Vp)
        self.b_slab = jnp.concatenate([
            _pad1(self.b_attn, Lp),
            _pad1(self.b_comb, Hp),
            _pad_gates_b(self.b_lstm, H, Hp),
            _pad1(self.b_out, Vp),
        ]).reshape(1, -1).astype(f32)            # (1, Lp + 5*Hp + Vp)

        self._kernel = make_attn_decoder_kernel(H, V, L, Hp, Vp, Lp)
        self._calls = {}                          # pallas_call cache keyed by T

    # -------------------------------------------------------------------
    def init_hidden(self):
        H = self.hidden_size
        return (jnp.zeros((1, 1, H), jnp.float32),
                jnp.zeros((1, 1, H), jnp.float32))

    # -------------------------------------------------------------------
    def _get_call(self, T):
        if T in self._calls:
            return self._calls[T]
        f32 = jnp.float32
        OUT_W = self.Vp + 2 * self.Hp + self.Lp
        vmem = pl.BlockSpec(memory_space=pltpu.MemorySpace.VMEM)
        call = pl.pallas_call(
            self._kernel,
            grid=(T,),                              # sequential time steps
            out_shape=jax.ShapeDtypeStruct((T, OUT_W), f32),
            in_specs=[vmem] * 5,                    # whole-array VMEM residents
            out_specs=vmem,                         # single merged output slab
            scratch_shapes=[
                pltpu.VMEM((2, self.Hp), f32),              # h/c carry
                pltpu.VMEM((self.Lp, self.Hp), jnp.bfloat16)  # enc @ W_comb_a
            ],
            compiler_params=pltpu.CompilerParams(
                dimension_semantics=("arbitrary",)),        # steps are sequential
        )
        self._calls[T] = call
        return call

    # -------------------------------------------------------------------
    def decode(self, token_ids, hidden, encoder_outputs):
        """Fused teacher-forced decode over T tokens in ONE pallas_call.
        token_ids: int32 (T,); hidden: (h, c) each (1,1,H);
        encoder_outputs: (max_length, H).
        Returns (log_probs (T, V), (h_T, c_T) each (1,1,H), attn_w (T, L))."""
        H, V, L = self.hidden_size, self.output_size, self.max_length
        Hp, Vp, Lp = self.Hp, self.Vp, self.Lp
        f32 = jnp.float32
        T = int(token_ids.shape[0])

        # one gather + one pad/cast per *sequence* (amortised over T steps)
        emb_rows = self.embedding[token_ids]                      # (T, H)
        emb_all = jnp.zeros((T, Hp), f32).at[:, :H].set(emb_rows)
        h0c0 = (jnp.zeros((2, Hp), f32)
                .at[0, :H].set(hidden[0].reshape(H))
                .at[1, :H].set(hidden[1].reshape(H)))
        enc_p = (jnp.zeros((Lp, Hp), jnp.bfloat16)
                 .at[:L, :H].set(encoder_outputs.astype(jnp.bfloat16)))

        out = self._get_call(T)(emb_all, h0c0, enc_p, self.w_slab, self.b_slab)

        logp = out[:, :V]
        h_all = out[:, Vp:Vp + H]
        c_all = out[:, Vp + Hp:Vp + Hp + H]
        attn = out[:, Vp + 2 * Hp:Vp + 2 * Hp + L]
        h_T = h_all[-1].reshape(1, 1, H)
        c_T = c_all[-1].reshape(1, 1, H)
        return logp, (h_T, c_T), attn

    # -------------------------------------------------------------------
    def __call__(self, in_seq, hidden, encoder_outputs):
        """Module forward(): single decoder step (T=1 case of decode()).
        Returns (log_probs (1,V), (h_new, c_new) each (1,1,H),
                 attn_weights (1, max_length))."""
        tokens = jnp.asarray(in_seq, jnp.int32).reshape((1,))
        logp, (h1, c1), attn = self.decode(tokens, hidden, encoder_outputs)
        return logp[0:1], (h1, c1), attn[0:1]

    # -------------------------------------------------------------------
    # pure-JAX reference with matching numerics (bf16 matmul operands,
    # f32 accumulation / elementwise) — PyTorch op order (no associativity
    # rewrite) — for correctness checks.
    def reference(self, in_seq, hidden, encoder_outputs):
        f32, bf16 = jnp.float32, jnp.bfloat16
        H = self.hidden_size

        def mm(a, b):
            return jnp.dot(a.astype(bf16), b.astype(bf16),
                           preferred_element_type=f32)

        emb = self.embedding[in_seq].reshape(1, H)
        h = hidden[0].reshape(1, H)
        c = hidden[1].reshape(1, H)
        attn_logits = mm(emb, self.w_attn_e) + mm(h, self.w_attn_h) + self.b_attn
        attn_w = jax.nn.softmax(attn_logits, axis=1)
        attn_applied = mm(attn_w, encoder_outputs)
        x = jax.nn.relu(mm(emb, self.w_comb_e)
                        + mm(attn_applied, self.w_comb_a) + self.b_comb)
        gates = mm(x, self.w_ih) + mm(h, self.w_hh) + self.b_lstm
        i_g = jax.nn.sigmoid(gates[:, 0:H])
        f_g = jax.nn.sigmoid(gates[:, H:2 * H])
        g_g = jnp.tanh(gates[:, 2 * H:3 * H])
        o_g = jax.nn.sigmoid(gates[:, 3 * H:4 * H])
        c_new = f_g * c + i_g * g_g
        h_new = o_g * jnp.tanh(c_new)
        logp = jax.nn.log_softmax(mm(h_new, self.w_out) + self.b_out, axis=1)
        return logp, (h_new, c_new), attn_w


if __name__ == "__main__":
    hidden_size = 32
    output_size = 64
    max_length = 8

    key = jax.random.PRNGKey(0)
    k_params, k_enc, k_h, k_c = jax.random.split(key, 4)

    model = AttnDecoderRNNPallas(hidden_size, output_size, max_length, k_params)

    in_seq = jnp.int32(3)                                            # token id
    hidden = (jax.random.normal(k_h, (1, 1, hidden_size), jnp.float32) * 0.1,
              jax.random.normal(k_c, (1, 1, hidden_size), jnp.float32) * 0.1)
    encoder_outputs = jax.random.normal(k_enc, (max_length, hidden_size),
                                        jnp.float32) * 0.1

    # ---- single step (module forward semantics) --------------------------
    logp, (h_new, c_new), attn_w = model(in_seq, hidden, encoder_outputs)
    jax.block_until_ready((logp, h_new, c_new, attn_w))

    r_logp, (r_h, r_c), r_aw = model.reference(in_seq, hidden, encoder_outputs)
    assert jnp.allclose(logp, r_logp, atol=3e-3), "log_probs mismatch"
    assert jnp.allclose(h_new.reshape(1, -1), r_h, atol=3e-3), "h mismatch"
    assert jnp.allclose(c_new.reshape(1, -1), r_c, atol=3e-3), "c mismatch"
    assert jnp.allclose(attn_w, r_aw, atol=3e-3), "attn_weights mismatch"

    # ---- fused multi-step decode (validates the VMEM-resident loop carry) -
    tokens = jnp.array([3, 17, 5, 42], jnp.int32)
    logp_all, (h_T, c_T), aw_all = model.decode(tokens, hidden, encoder_outputs)
    jax.block_until_ready((logp_all, h_T, c_T, aw_all))

    hid = hidden
    for step in range(tokens.shape[0]):
        r_lp, hid, r_aw = model.reference(tokens[step], hid, encoder_outputs)
        assert jnp.allclose(logp_all[step:step + 1], r_lp, atol=5e-3), \
            f"decode log_probs mismatch at step {step}"
        assert jnp.allclose(aw_all[step:step + 1], r_aw, atol=5e-3), \
            f"decode attn_weights mismatch at step {step}"
    assert jnp.allclose(h_T.reshape(1, -1), hid[0], atol=5e-3), "decode h_T mismatch"
    assert jnp.allclose(c_T.reshape(1, -1), hid[1], atol=5e-3), "decode c_T mismatch"

    print("KERNEL_OK")
</pallas_src>

<mosaic_0001>
module attributes {stable_mosaic.version = 11 : i64} {
  func.func @kernel(%arg0: i32, %arg1: memref<1x128xf32, #tpu.memory_space<vmem>>, %arg2: memref<2x128xf32, #tpu.memory_space<vmem>>, %arg3: memref<128x128xbf16, #tpu.memory_space<vmem>>, %arg4: memref<128x1664xbf16, #tpu.memory_space<vmem>>, %arg5: memref<1x896xf32, #tpu.memory_space<vmem>>, %arg6: memref<1x512xf32, #tpu.memory_space<vmem>>, %arg7: memref<2x128xf32, #tpu.memory_space<vmem>>, %arg8: memref<128x128xbf16, #tpu.memory_space<vmem>>) attributes {dimension_semantics = [#tpu.dimension_semantics<arbitrary>], iteration_bounds = array<i64: 1>, scalar_prefetch = 0 : i64, scratch_operands = 2 : i64, tpu.core_type = #tpu.core_type<tc>, window_params = [{pipeline_mode = #tpu.pipeline_mode<synchronous>, transform_indices = @transform_0, window_bounds = array<i64: 1, 128>}, {pipeline_mode = #tpu.pipeline_mode<synchronous>, transform_indices = @transform_1, window_bounds = array<i64: 2, 128>}, {pipeline_mode = #tpu.pipeline_mode<synchronous>, transform_indices = @transform_2, window_bounds = array<i64: 128, 128>}, {pipeline_mode = #tpu.pipeline_mode<synchronous>, transform_indices = @transform_3, window_bounds = array<i64: 128, 1664>}, {pipeline_mode = #tpu.pipeline_mode<synchronous>, transform_indices = @transform_4, window_bounds = array<i64: 1, 896>}, {pipeline_mode = #tpu.pipeline_mode<synchronous>, transform_indices = @transform_5, window_bounds = array<i64: 1, 512>}]} {
    %c0_i32 = arith.constant 0 : i32
    %0 = arith.cmpi eq, %arg0, %c0_i32 : i32
    %1 = arith.extui %0 : i1 to i32
    %c0_i32_0 = arith.constant 0 : i32
    %2 = arith.cmpi ne, %1, %c0_i32_0 : i32
    scf.if %2 {
      %c0_37 = arith.constant 0 : index
      %c0_38 = arith.constant 0 : index
      %105 = vector.load %arg2[%c0_37, %c0_38] : memref<2x128xf32, #tpu.memory_space<vmem>>, vector<2x128xf32>
      %c0_39 = arith.constant 0 : index
      %c0_40 = arith.constant 0 : index
      %106 = vector.load %arg7[%c0_39, %c0_40] : memref<2x128xf32, #tpu.memory_space<vmem>>, vector<2x128xf32>
      tpu.vector_store %arg7[%c0_39, %c0_40], %105 {strides = array<i32>} : memref<2x128xf32, #tpu.memory_space<vmem>>, vector<2x128xf32>,
      %c0_41 = arith.constant 0 : index
      %c0_42 = arith.constant 0 : index
      %107 = vector.load %arg3[%c0_41, %c0_42] : memref<128x128xbf16, #tpu.memory_space<vmem>>, vector<128x128xbf16>
      %c0_43 = arith.constant 0 : index
      %c896 = arith.constant 896 : index
      %108 = vector.load %arg4[%c0_43, %c896] : memref<128x1664xbf16, #tpu.memory_space<vmem>>, vector<128x128xbf16>
      %cst_44 = arith.constant dense<0.000000e+00> : vector<128x128xf32>
      %109 = tpu.matmul %107, %108, %cst_44 {dimension_numbers = #tpu.dot_dimension_numbers<[1], [0], [0], [1], [0, 0, 1, 1], [], []>} : vector<128x128xbf16>, vector<128x128xbf16>, vector<128x128xf32> -> vector<128x128xf32>
      %110 = arith.truncf %109 : vector<128x128xf32> to vector<128x128xbf16>
      %c0_45 = arith.constant 0 : index
      %c0_46 = arith.constant 0 : index
      %111 = vector.load %arg8[%c0_45, %c0_46] : memref<128x128xbf16, #tpu.memory_space<vmem>>, vector<128x128xbf16>
      tpu.vector_store %arg8[%c0_45, %c0_46], %110 {strides = array<i32>} : memref<128x128xbf16, #tpu.memory_space<vmem>>, vector<128x128xbf16>,
    } else {
    }
    %3 = arith.index_cast %arg0 : i32 to index
    %c0 = arith.constant 0 : index
    %4 = vector.load %arg1[%3, %c0] : memref<1x128xf32, #tpu.memory_space<vmem>>, vector<1x128xf32>
    %c0_1 = arith.constant 0 : index
    %c0_2 = arith.constant 0 : index
    %5 = vector.load %arg7[%c0_1, %c0_2] : memref<2x128xf32, #tpu.memory_space<vmem>>, vector<1x128xf32>
    %c1 = arith.constant 1 : index
    %c0_3 = arith.constant 0 : index
    %6 = vector.load %arg7[%c1, %c0_3] : memref<2x128xf32, #tpu.memory_space<vmem>>, vector<1x128xf32>
    %7 = tpu.concatenate %4, %5 in 0 : vector<1x128xf32>, vector<1x128xf32> -> vector<2x128xf32>
    %8 = arith.truncf %7 : vector<2x128xf32> to vector<2x128xbf16>
    %c0_4 = arith.constant 0 : index
    %c0_5 = arith.constant 0 : index
    %9 = vector.load %arg4[%c0_4, %c0_5] : memref<128x1664xbf16, #tpu.memory_space<vmem>>, vector<128x896xbf16>
    %cst = arith.constant dense<0.000000e+00> : vector<2x896xf32>
    %10 = tpu.matmul %8, %9, %cst {dimension_numbers = #tpu.dot_dimension_numbers<[1], [0], [0], [1], [0, 0, 1, 1], [], []>} : vector<2x128xbf16>, vector<128x896xbf16>, vector<2x896xf32> -> vector<2x896xf32>
    %11 = vector.extract_strided_slice %10 {offsets = [0, 0], sizes = [1, 128], strides = [1, 1]} : vector<2x896xf32> to vector<1x128xf32>
    %12 = vector.extract_strided_slice %10 {offsets = [1, 256], sizes = [1, 128], strides = [1, 1]} : vector<2x896xf32> to vector<1x128xf32>
    %13 = arith.addf %11, %12 : vector<1x128xf32>
    %c0_6 = arith.constant 0 : index
    %c0_7 = arith.constant 0 : index
    %14 = vector.load %arg5[%c0_6, %c0_7] : memref<1x896xf32, #tpu.memory_space<vmem>>, vector<1x128xf32>
    %15 = arith.addf %13, %14 : vector<1x128xf32>
    %16 = tpu.iota {dimensions = array<i32: 1>} : vector<1x128xi32>
    %c8_i32 = arith.constant 8 : i32
    %17 = vector.broadcast %c8_i32 : i32 to vector<1x128xi32>
    %18 = arith.cmpi slt, %16, %17 : vector<1x128xi32>
    %cst_8 = arith.constant 0xFF800000 : f32
    %19 = vector.broadcast %cst_8 : f32 to vector<1x128xf32>
    %20 = arith.select %18, %15, %19 : vector<1x128xi1>, vector<1x128xf32>
    %cst_9 = arith.constant dense<0xFF800000> : vector<1xf32>
    %21 = vector.multi_reduction <maximumf>, %20, %cst_9 [1] : vector<1x128xf32> to vector<1xf32>
    %22 = vector.shape_cast %21 : vector<1xf32> to vector<1x1xf32>
    %23 = vector.broadcast %22 : vector<1x1xf32> to vector<1x128xf32>
    %24 = arith.subf %20, %23 : vector<1x128xf32>
    %25 = math.exp %24 : vector<1x128xf32>
    %cst_10 = arith.constant dense<0.000000e+00> : vector<1xf32>
    %26 = vector.multi_reduction <add>, %25, %cst_10 [1] : vector<1x128xf32> to vector<1xf32>
    %27 = vector.shape_cast %26 : vector<1xf32> to vector<1x1xf32>
    %28 = vector.broadcast %27 : vector<1x1xf32> to vector<1x128xf32>
    %29 = arith.divf %25, %28 : vector<1x128xf32>
    %30 = arith.index_cast %arg0 : i32 to index
    %c384 = arith.constant 384 : index
    %31 = vector.load %arg6[%30, %c384] : memref<1x512xf32, #tpu.memory_space<vmem>>, vector<1x128xf32>
    tpu.vector_store %arg6[%30, %c384], %29 {strides = array<i32>} : memref<1x512xf32, #tpu.memory_space<vmem>>, vector<1x128xf32>,
    %32 = vector.extract_strided_slice %10 {offsets = [0, 128], sizes = [1, 128], strides = [1, 1]} : vector<2x896xf32> to vector<1x128xf32>
    %33 = arith.truncf %29 : vector<1x128xf32> to vector<1x128xbf16>
    %c0_11 = arith.constant 0 : index
    %c0_12 = arith.constant 0 : index
    %34 = vector.load %arg8[%c0_11, %c0_12] : memref<128x128xbf16, #tpu.memory_space<vmem>>, vector<128x128xbf16>
    %cst_13 = arith.constant dense<0.000000e+00> : vector<1x128xf32>
    %35 = tpu.matmul %33, %34, %cst_13 {dimension_numbers = #tpu.dot_dimension_numbers<[1], [0], [0], [1], [0, 0, 1, 1], [], []>} : vector<1x128xbf16>, vector<128x128xbf16>, vector<1x128xf32> -> vector<1x128xf32>
    %36 = arith.addf %32, %35 : vector<1x128xf32>
    %c0_14 = arith.constant 0 : index
    %c128 = arith.constant 128 : index
    %37 = vector.load %arg5[%c0_14, %c128] : memref<1x896xf32, #tpu.memory_space<vmem>>, vector<1x128xf32>
    %38 = arith.addf %36, %37 : vector<1x128xf32>
    %cst_15 = arith.constant 0.000000e+00 : f32
    %39 = vector.broadcast %cst_15 : f32 to vector<1x128xf32>
    %40 = arith.maximumf %38, %39 : vector<1x128xf32>
    %41 = vector.extract_strided_slice %10 {offsets = [1, 384], sizes = [1, 512], strides = [1, 1]} : vector<2x896xf32> to vector<1x512xf32>
    %42 = arith.truncf %40 : vector<1x128xf32> to vector<1x128xbf16>
    %c0_16 = arith.constant 0 : index
    %c1024 = arith.constant 1024 : index
    %43 = vector.load %arg4[%c0_16, %c1024] : memref<128x1664xbf16, #tpu.memory_space<vmem>>, vector<128x512xbf16>
    %cst_17 = arith.constant dense<0.000000e+00> : vector<1x512xf32>
    %44 = tpu.matmul %42, %43, %cst_17 {dimension_numbers = #tpu.dot_dimension_numbers<[1], [0], [0], [1], [0, 0, 1, 1], [], []>} : vector<1x128xbf16>, vector<128x512xbf16>, vector<1x512xf32> -> vector<1x512xf32>
    %45 = arith.addf %41, %44 : vector<1x512xf32>
    %c0_18 = arith.constant 0 : index
    %c256 = arith.constant 256 : index
    %46 = vector.load %arg5[%c0_18, %c256] : memref<1x896xf32, #tpu.memory_space<vmem>>, vector<1x512xf32>
    %47 = arith.addf %45, %46 : vector<1x512xf32>
    %48 = vector.extract_strided_slice %47 {offsets = [0, 0], sizes = [1, 128], strides = [1, 1]} : vector<1x512xf32> to vector<1x128xf32>
    %49 = arith.negf %48 : vector<1x128xf32>
    %50 = math.exp %49 : vector<1x128xf32>
    %cst_19 = arith.constant 1.000000e+00 : f32
    %51 = vector.broadcast %cst_19 : f32 to vector<1x128xf32>
    %52 = arith.addf %51, %50 : vector<1x128xf32>
    %53 = arith.divf %51, %52 : vector<1x128xf32>
    %54 = vector.extract_strided_slice %47 {offsets = [0, 128], sizes = [1, 128], strides = [1, 1]} : vector<1x512xf32> to vector<1x128xf32>
    %55 = arith.negf %54 : vector<1x128xf32>
    %56 = math.exp %55 : vector<1x128xf32>
    %cst_20 = arith.constant 1.000000e+00 : f32
    %57 = vector.broadcast %cst_20 : f32 to vector<1x128xf32>
    %58 = arith.addf %57, %56 : vector<1x128xf32>
    %59 = arith.divf %57, %58 : vector<1x128xf32>
    %60 = vector.extract_strided_slice %47 {offsets = [0, 256], sizes = [1, 128], strides = [1, 1]} : vector<1x512xf32> to vector<1x128xf32>
    %61 = math.tanh %60 : vector<1x128xf32>
    %62 = vector.extract_strided_slice %47 {offsets = [0, 384], sizes = [1, 128], strides = [1, 1]} : vector<1x512xf32> to vector<1x128xf32>
    %63 = arith.negf %62 : vector<1x128xf32>
    %64 = math.exp %63 : vector<1x128xf32>
    %cst_21 = arith.constant 1.000000e+00 : f32
    %65 = vector.broadcast %cst_21 : f32 to vector<1x128xf32>
    %66 = arith.addf %65, %64 : vector<1x128xf32>
    %67 = arith.divf %65, %66 : vector<1x128xf32>
    %68 = arith.mulf %59, %6 : vector<1x128xf32>
    %69 = arith.mulf %53, %61 : vector<1x128xf32>
    %70 = arith.addf %68, %69 : vector<1x128xf32>
    %71 = math.tanh %70 : vector<1x128xf32>
    %72 = arith.mulf %67, %71 : vector<1x128xf32>
    %c0_22 = arith.constant 0 : index
    %c0_23 = arith.constant 0 : index
    %73 = vector.load %arg7[%c0_22, %c0_23] : memref<2x128xf32, #tpu.memory_space<vmem>>, vector<1x128xf32>
    tpu.vector_store %arg7[%c0_22, %c0_23], %72 {strides = array<i32>} : memref<2x128xf32, #tpu.memory_space<vmem>>, vector<1x128xf32>,
    %c1_24 = arith.constant 1 : index
    %c0_25 = arith.constant 0 : index
    %74 = vector.load %arg7[%c1_24, %c0_25] : memref<2x128xf32, #tpu.memory_space<vmem>>, vector<1x128xf32>
    tpu.vector_store %arg7[%c1_24, %c0_25], %70 {strides = array<i32>} : memref<2x128xf32, #tpu.memory_space<vmem>>, vector<1x128xf32>,
    %75 = arith.index_cast %arg0 : i32 to index
    %c128_26 = arith.constant 128 : index
    %76 = vector.load %arg6[%75, %c128_26] : memref<1x512xf32, #tpu.memory_space<vmem>>, vector<1x128xf32>
    tpu.vector_store %arg6[%75, %c128_26], %72 {strides = array<i32>} : memref<1x512xf32, #tpu.memory_space<vmem>>, vector<1x128xf32>,
    %77 = arith.index_cast %arg0 : i32 to index
    %c256_27 = arith.constant 256 : index
    %78 = vector.load %arg6[%77, %c256_27] : memref<1x512xf32, #tpu.memory_space<vmem>>, vector<1x128xf32>
    tpu.vector_store %arg6[%77, %c256_27], %70 {strides = array<i32>} : memref<1x512xf32, #tpu.memory_space<vmem>>, vector<1x128xf32>,
    %79 = arith.truncf %72 : vector<1x128xf32> to vector<1x128xbf16>
    %c0_28 = arith.constant 0 : index
    %c1536 = arith.constant 1536 : index
    %80 = vector.load %arg4[%c0_28, %c1536] : memref<128x1664xbf16, #tpu.memory_space<vmem>>, vector<128x128xbf16>
    %cst_29 = arith.constant dense<0.000000e+00> : vector<1x128xf32>
    %81 = tpu.matmul %79, %80, %cst_29 {dimension_numbers = #tpu.dot_dimension_numbers<[1], [0], [0], [1], [0, 0, 1, 1], [], []>} : vector<1x128xbf16>, vector<128x128xbf16>, vector<1x128xf32> -> vector<1x128xf32>
    %c0_30 = arith.constant 0 : index
    %c768 = arith.constant 768 : index
    %82 = vector.load %arg5[%c0_30, %c768] : memref<1x896xf32, #tpu.memory_space<vmem>>, vector<1x128xf32>
    %83 = arith.addf %81, %82 : vector<1x128xf32>
    %84 = tpu.iota {dimensions = array<i32: 1>} : vector<1x128xi32>
    %c64_i32 = arith.constant 64 : i32
    %85 = vector.broadcast %c64_i32 : i32 to vector<1x128xi32>
    %86 = arith.cmpi slt, %84, %85 : vector<1x128xi32>
    %cst_31 = arith.constant 0xFF800000 : f32
    %87 = vector.broadcast %cst_31 : f32 to vector<1x128xf32>
    %88 = arith.select %86, %83, %87 : vector<1x128xi1>, vector<1x128xf32>
    %cst_32 = arith.constant dense<0xFF800000> : vector<1xf32>
    %89 = vector.multi_reduction <maximumf>, %88, %cst_32 [1] : vector<1x128xf32> to vector<1xf32>
    %90 = vector.shape_cast %89 : vector<1xf32> to vector<1x1xf32>
    %91 = vector.broadcast %90 : vector<1x1xf32> to vector<1x128xf32>
    %92 = arith.subf %88, %91 : vector<1x128xf32>
    %93 = math.exp %92 : vector<1x128xf32>
    %cst_33 = arith.constant dense<0.000000e+00> : vector<1xf32>
    %94 = vector.multi_reduction <add>, %93, %cst_33 [1] : vector<1x128xf32> to vector<1xf32>
    %95 = vector.shape_cast %94 : vector<1xf32> to vector<1x1xf32>
    %96 = math.log %95 : vector<1x1xf32>
    %97 = vector.broadcast %96 : vector<1x1xf32> to vector<1x128xf32>
    %98 = arith.subf %92, %97 : vector<1x128xf32>
    %c64_i32_34 = arith.constant 64 : i32
    %99 = vector.broadcast %c64_i32_34 : i32 to vector<1x128xi32>
    %100 = arith.cmpi slt, %84, %99 : vector<1x128xi32>
    %cst_35 = arith.constant 0.000000e+00 : f32
    %101 = vector.broadcast %cst_35 : f32 to vector<1x128xf32>
    %102 = arith.select %100, %98, %101 : vector<1x128xi1>, vector<1x128xf32>
    %103 = arith.index_cast %arg0 : i32 to index
    %c0_36 = arith.constant 0 : index
    %104 = vector.load %arg6[%103, %c0_36] : memref<1x512xf32, #tpu.memory_space<vmem>>, vector<1x128xf32>
    tpu.vector_store %arg6[%103, %c0_36], %102 {strides = array<i32>} : memref<1x512xf32, #tpu.memory_space<vmem>>, vector<1x128xf32>,
    return
  }
  func.func @transform_0(%arg0: i32) -> (i32, i32) {
    %c0_i32 = arith.constant 0 : i32
    %c0_i32_0 = arith.constant 0 : i32
    %c0_i32_1 = arith.constant 0 : i32
    return %c0_i32, %c0_i32_0 : i32, i32
  }
  func.func @transform_1(%arg0: i32) -> (i32, i32) {
    %c0_i32 = arith.constant 0 : i32
    %c0_i32_0 = arith.constant 0 : i32
    %c0_i32_1 = arith.constant 0 : i32
    return %c0_i32, %c0_i32_0 : i32, i32
  }
  func.func @transform_2(%arg0: i32) -> (i32, i32) {
    %c0_i32 = arith.constant 0 : i32
    %c0_i32_0 = arith.constant 0 : i32
    %c0_i32_1 = arith.constant 0 : i32
    return %c0_i32, %c0_i32_0 : i32, i32
  }
  func.func @transform_3(%arg0: i32) -> (i32, i32) {
    %c0_i32 = arith.constant 0 : i32
    %c0_i32_0 = arith.constant 0 : i32
    %c0_i32_1 = arith.constant 0 : i32
    return %c0_i32, %c0_i32_0 : i32, i32
  }
  func.func @transform_4(%arg0: i32) -> (i32, i32) {
    %c0_i32 = arith.constant 0 : i32
    %c0_i32_0 = arith.constant 0 : i32
    %c0_i32_1 = arith.constant 0 : i32
    return %c0_i32, %c0_i32_0 : i32, i32
  }
  func.func @transform_5(%arg0: i32) -> (i32, i32) {
    %c0_i32 = arith.constant 0 : i32
    %c0_i32_0 = arith.constant 0 : i32
    %c0_i32_1 = arith.constant 0 : i32
    return %c0_i32, %c0_i32_0 : i32, i32
  }
}

</mosaic_0001>

<llo_original>
// kernel: tpu_custom_call.1
$region0: #{tpu_custom_call.1}
  #allocation0 [shape = 'u32[]', space=smem, size = 0x4, offset = 0x4, fixed_abs, tag = 'smem constant byte address 0x4 - core index']
  #allocation1 [shape = 'u32[144,128]{1,0:T(1,128)}', space=vmem, size = 0x12000, scoped, tag = 'internal scratch']
  #allocation2 [shape = 'f32[2,128]{1,0:T(2,128)}', space=vmem, size = 0x400, scoped, tag = 'scratch operand']
  #allocation3 [shape = 'bf16[128,128]{1,0:T(16,128)(2,1)}', space=vmem, size = 0x8000, scoped, tag = 'scratch operand']
  %s0 = inlined_call_operand.hbm [shape: f32[1,128], index: 0, kind: input, shape index: {}]
  %s1 = inlined_call_operand.vmem [shape: f32[2,128], index: 1, kind: input, shape index: {}]
  %s2 = inlined_call_operand.hbm [shape: bf16[128,128], index: 2, kind: input, shape index: {}]
  %s3 = inlined_call_operand.hbm [shape: bf16[128,1664], index: 3, kind: input, shape index: {}]
  %s4 = inlined_call_operand.vmem [shape: f32[1,896], index: 4, kind: input, shape index: {}]
  %s5 = inlined_call_operand.hbm [shape: f32[1,512], index: 5, kind: output, shape index: {}]
  %s6 = sld [smem:[#allocation0]]
  $region46: #{tpu_custom_call.1} parent=0
    _
  %s8 = ssub.s32 1, %s6
  %s9 = scalar_select 0, %s8, %s6
  $region1: #{tpu_custom_call.1} parent=0
    #allocation4 [shape = 'u8[512]{0}', space=vmem, size = 0x400, scoped, tag = 'input window, operand 0, single buffered']
    #allocation5 [shape = 's32[1]{0}', space=sflag, size = 0x4, scoped, tag = 'scoped memory for tpu_custom_call.1']
    #allocation6 [shape = 's32[1]{0}', space=sflag, size = 0x4, scoped, tag = 'scoped memory for tpu_custom_call.1']
    #allocation7 [shape = 'u8[32768]{0}', space=vmem, size = 0x8000, scoped, tag = 'input window, operand 2, single buffered']
    #allocation8 [shape = 's32[1]{0}', space=sflag, size = 0x4, scoped, tag = 'scoped memory for tpu_custom_call.1']
    #allocation9 [shape = 'u8[425984]{0}', space=vmem, size = 0x68000, scoped, tag = 'input window, operand 3, single buffered']
    #allocation10 [shape = 'u8[2048]{0}', space=vmem, size = 0x800, scoped, tag = 'output window, operand 0, single buffered']
    %10 = vsyncpa [#allocation5], 0
    %11 = vsyncpa [#allocation8], 0
    %12 = vsyncpa [#allocation6], 0
    // Predicated region
    $region2: #{tpu_custom_call.1} parent=1 // pred_check
      _
    $region3: #{tpu_custom_call.1} parent=1 // pred_check_branch
      %14 = sbr.rel (0) target = $region5
    $region4: #{tpu_custom_call.1} parent=1 // pred_region
      %s16 = ssub.s32 16, 16
      %17 = vsyncadd [#allocation5], %s16
      %s19 = sshll.u32 [#allocation4], 4
      %s20 = int_to_ptr.vmem [resolvable:$true] %s19
      %22 = dma.hbm_to_vmem [thread:$0]  %s0, 16, %s20, [#allocation5]
    $region5: #{tpu_custom_call.1} parent=1 // pred_fallthru
      _
    // Predicated region
    $region6: #{tpu_custom_call.1} parent=1 // pred_check
      _
    $region7: #{tpu_custom_call.1} parent=1 // pred_check_branch
      %24 = sbr.rel (0) target = $region9
    $region8: #{tpu_custom_call.1} parent=1 // pred_region
      _
    $region9: #{tpu_custom_call.1} parent=1 // pred_fallthru
      _
    // Predicated region
    $region10: #{tpu_custom_call.1} parent=1 // pred_check
      _
    $region11: #{tpu_custom_call.1} parent=1 // pred_check_branch
      %26 = sbr.rel (0) target = $region13
    $region12: #{tpu_custom_call.1} parent=1 // pred_region
      %s28 = ssub.s32 1024, 1024
      %29 = vsyncadd [#allocation8], %s28
      %s30 = sshll.u32 [#allocation7], 4
      %s31 = int_to_ptr.vmem [resolvable:$true] %s30
      %36 = dma.hbm_to_vmem [thread:$0]  %s2, 1024, %s31, [#allocation8], 64, 64, 4
    $region13: #{tpu_custom_call.1} parent=1 // pred_fallthru
      _
    // Predicated region
    $region14: #{tpu_custom_call.1} parent=1 // pred_check
      _
    $region15: #{tpu_custom_call.1} parent=1 // pred_check_branch
      %38 = sbr.rel (0) target = $region17
    $region16: #{tpu_custom_call.1} parent=1 // pred_region
      %s40 = ssub.s32 13312, 13312
      %41 = vsyncadd [#allocation8], %s40
      %s42 = sshll.u32 [#allocation9], 4
      %s43 = int_to_ptr.vmem [resolvable:$true] %s42
      %48 = dma.hbm_to_vmem [thread:$0]  %s3, 13312, %s43, [#allocation8], 832, 832, 52
    $region17: #{tpu_custom_call.1} parent=1 // pred_fallthru
      _
    // Predicated region
    $region18: #{tpu_custom_call.1} parent=1 // pred_check
      _
    $region19: #{tpu_custom_call.1} parent=1 // pred_check_branch
      %50 = sbr.rel (0) target = $region21
    $region20: #{tpu_custom_call.1} parent=1 // pred_region
      _
    $region21: #{tpu_custom_call.1} parent=1 // pred_fallthru
      _
    // Predicated region
    $region22: #{tpu_custom_call.1} parent=1 // pred_check
      _
    $region23: #{tpu_custom_call.1} parent=1 // pred_check_branch
      %52 = sbr.rel (0) target = $region25
    $region24: #{tpu_custom_call.1} parent=1 // pred_region
      %53 = dma.done [#allocation5], 16
    $region25: #{tpu_custom_call.1} parent=1 // pred_fallthru
      _
    // Predicated region
    $region26: #{tpu_custom_call.1} parent=1 // pred_check
      _
    $region27: #{tpu_custom_call.1} parent=1 // pred_check_branch
      %55 = sbr.rel (0) target = $region29
    $region28: #{tpu_custom_call.1} parent=1 // pred_region
      %56 = dma.done [#allocation8], 1024
    $region29: #{tpu_custom_call.1} parent=1 // pred_fallthru
      _
    // Predicated region
    $region30: #{tpu_custom_call.1} parent=1 // pred_check
      _
    $region31: #{tpu_custom_call.1} parent=1 // pred_check_branch
      %58 = sbr.rel (0) target = $region33
    $region32: #{tpu_custom_call.1} parent=1 // pred_region
      %59 = dma.done [#allocation8], 13312
    $region33: #{tpu_custom_call.1} parent=1 // pred_fallthru
      _
    %p61 = scmp.eq.s32.totalorder 0, 0
    // Predicated region
    $region34: #{tpu_custom_call.1} parent=1 // pred_check
      %p62 = pneg %p61
    $region35: #{tpu_custom_call.1} parent=1 // pred_check_branch
      %64 = sbr.rel (%p62) target = $region37
    $region36: #{tpu_custom_call.1} parent=1 // pred_region
      %v65 = vld [vmem:[%s1] sm:$0x3]
      %66 = vst [vmem:[#allocation2] sm:$0x3] %v65
      %v67 = vld [vmem:[#allocation7] sm:$0xf]
      %v68 = vld [vmem:[#allocation7 + $0x4] sm:$0xf]
      %v69 = vld [vmem:[#allocation7 + $0x8] sm:$0xf]
      %v70 = vld [vmem:[#allocation7 + $0xc] sm:$0xf]
      %v71 = vld [vmem:[#allocation7 + $0x10] sm:$0xf]
      %v72 = vld [vmem:[#allocation7 + $0x14] sm:$0xf]
      %v73 = vld [vmem:[#allocation7 + $0x18] sm:$0xf]
      %v74 = vld [vmem:[#allocation7 + $0x1c] sm:$0xf]
      %v75 = vld [vmem:[#allocation7 + $0x20] sm:$0xf]
      %v76 = vld [vmem:[#allocation7 + $0x24] sm:$0xf]
      %v77 = vld [vmem:[#allocation7 + $0x28] sm:$0xf]
      %v78 = vld [vmem:[#allocation7 + $0x2c] sm:$0xf]
      %v79 = vld [vmem:[#allocation7 + $0x30] sm:$0xf]
      %v80 = vld [vmem:[#allocation7 + $0x34] sm:$0xf]
      %v81 = vld [vmem:[#allocation7 + $0x38] sm:$0xf]
      %v82 = vld [vmem:[#allocation7 + $0x3c] sm:$0xf]
      %v83 = vld [vmem:[#allocation9 + $0x1c] sm:$0xf]
      %v84 = vld [vmem:[#allocation9 + $0x50] sm:$0xf]
      %v85 = vld [vmem:[#allocation9 + $0x84] sm:$0xf]
      %v86 = vld [vmem:[#allocation9 + $0xb8] sm:$0xf]
      %v87 = vld [vmem:[#allocation9 + $0xec] sm:$0xf]
      %v88 = vld [vmem:[#allocation9 + $0x120] sm:$0xf]
      %v89 = vld [vmem:[#allocation9 + $0x154] sm:$0xf]
      %v90 = vld [vmem:[#allocation9 + $0x188] sm:$0xf]
      %v91 = vld [vmem:[#allocation9 + $0x1bc] sm:$0xf]
      %v92 = vld [vmem:[#allocation9 + $0x1f0] sm:$0xf]
      %v93 = vld [vmem:[#allocation9 + $0x224] sm:$0xf]
      %v94 = vld [vmem:[#allocation9 + $0x258] sm:$0xf]
      %v95 = vld [vmem:[#allocation9 + $0x28c] sm:$0xf]
      %v96 = vld [vmem:[#allocation9 + $0x2c0] sm:$0xf]
      %v97 = vld [vmem:[#allocation9 + $0x2f4] sm:$0xf]
      %v98 = vld [vmem:[#allocation9 + $0x328] sm:$0xf]
      %v115 = vunpack.c.l.b16 %v67
      %v116 = vunpack.c.l.b16 %v68
      %v117 = vunpack.c.l.b16 %v69
      %v118 = vunpack.c.l.b16 %v70
      %v119 = vunpack.c.l.b16 %v71
      %v120 = vunpack.c.l.b16 %v72
      %v121 = vunpack.c.l.b16 %v73
      %v122 = vunpack.c.l.b16 %v74
      %v123 = vunpack.c.l.b16 %v75
      %v124 = vunpack.c.l.b16 %v76
      %v125 = vunpack.c.l.b16 %v77
      %v126 = vunpack.c.l.b16 %v78
      %v127 = vunpack.c.l.b16 %v79
      %v128 = vunpack.c.l.b16 %v80
      %v129 = vunpack.c.l.b16 %v81
      %v130 = vunpack.c.l.b16 %v82
      %v131 = vpack.c.b16 %v116, %v115
      %v132 = vpack.c.b16 %v118, %v117
      %v133 = vpack.c.b16 %v120, %v119
      %v134 = vpack.c.b16 %v122, %v121
      %v135 = vpack.c.b16 %v124, %v123
      %v136 = vpack.c.b16 %v126, %v125
      %v137 = vpack.c.b16 %v128, %v127
      %v138 = vpack.c.b16 %v130, %v129
      %v163 = vunpack.c.l.b16 %v83
      %v164 = vunpack.c.l.b16 %v84
      %v165 = vunpack.c.l.b16 %v85
      %v166 = vunpack.c.l.b16 %v86
      %v167 = vunpack.c.l.b16 %v87
      %v168 = vunpack.c.l.b16 %v88
      %v169 = vunpack.c.l.b16 %v89
      %v170 = vunpack.c.l.b16 %v90
      %v171 = vunpack.c.l.b16 %v91
      %v172 = vunpack.c.l.b16 %v92
      %v173 = vunpack.c.l.b16 %v93
      %v174 = vunpack.c.l.b16 %v94
      %v175 = vunpack.c.l.b16 %v95
      %v176 = vunpack.c.l.b16 %v96
      %v177 = vunpack.c.l.b16 %v97
      %v178 = vunpack.c.l.b16 %v98
      %v179 = vpack.c.b16 %v164, %v163
      %v180 = vpack.c.b16 %v166, %v165
      %v181 = vpack.c.b16 %v168, %v167
      %v182 = vpack.c.b16 %v170, %v169
      %v183 = vpack.c.b16 %v172, %v171
      %v184 = vpack.c.b16 %v174, %v173
      %v185 = vpack.c.b16 %v176, %v175
      %v186 = vpack.c.b16 %v178, %v177
      %195 = vmatprep.subr.bf16.mxu0 0
      %196 = vmatpush1.bf16.msra.mxu0 %v179
      %197 = vmatprep.subr.bf16.mxu0 0
      %198 = vmatpush1.bf16.msra.mxu0 %v180
      %199 = vmatprep.subr.bf16.mxu0 0
      %200 = vmatpush1.bf16.msra.mxu0 %v181
      %201 = vmatprep.subr.bf16.mxu0 0
      %202 = vmatpush1.bf16.msra.mxu0 %v182
      %203 = vmatprep.subr.bf16.mxu0 0
      %204 = vmatpush1.bf16.msra.mxu0 %v183
      %205 = vmatprep.subr.bf16.mxu0 0
      %206 = vmatpush1.bf16.msra.mxu0 %v184
      %207 = vmatprep.subr.bf16.mxu0 0
      %208 = vmatpush1.bf16.msra.mxu0 %v185
      %209 = vmatprep.subr.bf16.mxu0 0
      %210 = vmatpush1.bf16.msra.mxu0 %v186
      %211 = vmatprep.subr.bf16.mxu0 0
      %212 = vmatpush1.bf16.msra.mxu0 0
      %213 = vmatprep.subr.bf16.mxu0 0
      %214 = vmatpush1.bf16.msra.mxu0 0
      %215 = vmatprep.subr.bf16.mxu0 0
      %216 = vmatpush1.bf16.msra.mxu0 0
      %217 = vmatprep.subr.bf16.mxu0 0
      %218 = vmatpush1.bf16.msra.mxu0 0
      %219 = vmatprep.subr.bf16.mxu0 0
      %220 = vmatpush1.bf16.msra.mxu0 0
      %221 = vmatprep.subr.bf16.mxu0 0
      %222 = vmatpush1.bf16.msra.mxu0 0
      %223 = vmatprep.subr.bf16.mxu0 0
      %224 = vmatpush1.bf16.msra.mxu0 0
      %225 = vmatprep.subr.bf16.mxu0 0
      %226 = vmatpush1.bf16.msra.mxu0 0
      %227 = vmatprep.mubr.bf16.mxu0 0
      %228 = vmatmul.mubr.bf16.gmra.mrb[0].mxu0 %v131
      %v229 = vpop.f32.mrb[0].mxu0
      %v230 = vadd.f32 0.0, %v229
      %v231 = vpop.f32.mrb[0].mxu0
      %v232 = vpop.f32.mrb[0].mxu0
      %v233 = vadd.f32 0.0, %v232
      %v234 = vpop.f32.mrb[0].mxu0
      %235 = vmatprep.mubr.bf16.mxu0 0
      %236 = vmatmul.mubr.bf16.gmra.mrb[0].mxu0 %v132
      %v237 = vpop.f32.mrb[0].mxu0
      %v238 = vadd.f32 0.0, %v237
      %v239 = vpop.f32.mrb[0].mxu0
      %v240 = vpop.f32.mrb[0].mxu0
      %v241 = vadd.f32 0.0, %v240
      %v242 = vpop.f32.mrb[0].mxu0
      %243 = vmatprep.mubr.bf16.mxu0 0
      %244 = vmatmul.mubr.bf16.gmra.mrb[0].mxu0 %v133
      %v245 = vpop.f32.mrb[0].mxu0
      %v246 = vadd.f32 0.0, %v245
      %v247 = vpop.f32.mrb[0].mxu0
      %v248 = vpop.f32.mrb[0].mxu0
      %v249 = vadd.f32 0.0, %v248
      %v250 = vpop.f32.mrb[0].mxu0
      %251 = vmatprep.mubr.bf16.mxu0 0
      %252 = vmatmul.mubr.bf16.gmra.mrb[0].mxu0 %v134
      %v253 = vpop.f32.mrb[0].mxu0
      %v254 = vadd.f32 0.0, %v253
      %v255 = vpop.f32.mrb[0].mxu0
      %v256 = vpop.f32.mrb[0].mxu0
      %v257 = vadd.f32 0.0, %v256
      %v258 = vpop.f32.mrb[0].mxu0
      %259 = vmatprep.mubr.bf16.mxu0 0
      %260 = vmatmul.mubr.bf16.gmra.mrb[0].mxu0 %v135
      %v261 = vpop.f32.mrb[0].mxu0
      %v262 = vadd.f32 0.0, %v261
      %v263 = vpop.f32.mrb[0].mxu0
      %v264 = vpop.f32.mrb[0].mxu0
      %v265 = vadd.f32 0.0, %v264
      %v266 = vpop.f32.mrb[0].mxu0
      %267 = vmatprep.mubr.bf16.mxu0 0
      %268 = vmatmul.mubr.bf16.gmra.mrb[0].mxu0 %v136
      %v269 = vpop.f32.mrb[0].mxu0
      %v270 = vadd.f32 0.0, %v269
      %v271 = vpop.f32.mrb[0].mxu0
      %v272 = vpop.f32.mrb[0].mxu0
      %v273 = vadd.f32 0.0, %v272
      %v274 = vpop.f32.mrb[0].mxu0
      %275 = vmatprep.mubr.bf16.mxu0 0
      %276 = vmatmul.mubr.bf16.gmra.mrb[0].mxu0 %v137
      %v277 = vpop.f32.mrb[0].mxu0
      %v278 = vadd.f32 0.0, %v277
      %v279 = vpop.f32.mrb[0].mxu0
      %v280 = vpop.f32.mrb[0].mxu0
      %v281 = vadd.f32 0.0, %v280
      %v282 = vpop.f32.mrb[0].mxu0
      %283 = vmatprep.mubr.bf16.mxu0 0
      %284 = vmatmul.mubr.bf16.gmra.mrb[0].mxu0 %v138
      %v285 = vpop.f32.mrb[0].mxu0
      %v286 = vadd.f32 0.0, %v285
      %v287 = vpop.f32.mrb[0].mxu0
      %v288 = vpop.f32.mrb[0].mxu0
      %v289 = vadd.f32 0.0, %v288
      %v290 = vpop.f32.mrb[0].mxu0
      %291 = vdwg.mxu0
      %v292 = vpack.c.bf16 %v233, %v230
      %v293 = vpack.c.bf16 %v241, %v238
      %v294 = vpack.c.bf16 %v249, %v246
      %v295 = vpack.c.bf16 %v257, %v254
      %v296 = vpack.c.bf16 %v265, %v262
      %v297 = vpack.c.bf16 %v273, %v270
      %v298 = vpack.c.bf16 %v281, %v278
      %v299 = vpack.c.bf16 %v289, %v286
      %300 = vst [vmem:[#allocation3] sm:$0xff] %v292
      %301 = vst [vmem:[#allocation3 + $0x8] sm:$0xff] %v293
      %302 = vst [vmem:[#allocation3 + $0x10] sm:$0xff] %v294
      %303 = vst [vmem:[#allocation3 + $0x18] sm:$0xff] %v295
      %304 = vst [vmem:[#allocation3 + $0x20] sm:$0xff] %v296
      %305 = vst [vmem:[#allocation3 + $0x28] sm:$0xff] %v297
      %306 = vst [vmem:[#allocation3 + $0x30] sm:$0xff] %v298
      %307 = vst [vmem:[#allocation3 + $0x38] sm:$0xff] %v299
    $region37: #{tpu_custom_call.1} parent=1 // pred_fallthru
      _
    %v308 = vld [vmem:[#allocation4] sm:$0x1]
    %v309 = vld [vmem:[#allocation2] sm:$0x1]
    %v310 = vld [vmem:[#allocation2 + $0x1] sm:$0x1]
    %v312 = vrot.slane %v309, 7
    %vm314 = vcmask 1040384
    %v315 = vsel %vm314, %v308, %v312
    %v316 = vpack.c.bf16 %v315, %v315
    %v317 = vld [vmem:[#allocation9] sm:$0xff]
    %v318 = vld [vmem:[#allocation9 + $0x8] sm:$0xff]
    %v319 = vld [vmem:[#allocation9 + $0x10] sm:$0xff]
    %v320 = vld [vmem:[#allocation9 + $0x18] sm:$0xf]
    %v321 = vld [vmem:[#allocation9 + $0x34] sm:$0xff]
    %v322 = vld [vmem:[#allocation9 + $0x3c] sm:$0xff]
    %v323 = vld [vmem:[#allocation9 + $0x44] sm:$0xff]
    %v324 = vld [vmem:[#allocation9 + $0x4c] sm:$0xf]
    %v325 = vld [vmem:[#allocation9 + $0x68] sm:$0xff]
    %v326 = vld [vmem:[#allocation9 + $0x70] sm:$0xff]
    %v327 = vld [vmem:[#allocation9 + $0x78] sm:$0xff]
    %v328 = vld [vmem:[#allocation9 + $0x80] sm:$0xf]
    %v329 = vld [vmem:[#allocation9 + $0x9c] sm:$0xff]
    %v330 = vld [vmem:[#allocation9 + $0xa4] sm:$0xff]
    %v331 = vld [vmem:[#allocation9 + $0xac] sm:$0xff]
    %v332 = vld [vmem:[#allocation9 + $0xb4] sm:$0xf]
    %v333 = vld [vmem:[#allocation9 + $0xd0] sm:$0xff]
    %v334 = vld [vmem:[#allocation9 + $0xd8] sm:$0xff]
    %v335 = vld [vmem:[#allocation9 + $0xe0] sm:$0xff]
    %v336 = vld [vmem:[#allocation9 + $0xe8] sm:$0xf]
    %v337 = vld [vmem:[#allocation9 + $0x104] sm:$0xff]
    %v338 = vld [vmem:[#allocation9 + $0x10c] sm:$0xff]
    %v339 = vld [vmem:[#allocation9 + $0x114] sm:$0xff]
    %v340 = vld [vmem:[#allocation9 + $0x11c] sm:$0xf]
    %v341 = vld [vmem:[#allocation9 + $0x138] sm:$0xff]
    %v342 = vld [vmem:[#allocation9 + $0x140] sm:$0xff]
    %v343 = vld [vmem:[#allocation9 + $0x148] sm:$0xff]
    %v344 = vld [vmem:[#allocation9 + $0x150] sm:$0xf]
    %v345 = vld [vmem:[#allocation9 + $0x16c] sm:$0xff]
    %v346 = vld [vmem:[#allocation9 + $0x174] sm:$0xff]
    %v347 = vld [vmem:[#allocation9 + $0x17c] sm:$0xff]
    %v348 = vld [vmem:[#allocation9 + $0x184] sm:$0xf]
    %v349 = vld [vmem:[#allocation9 + $0x1a0] sm:$0xff]
    %v350 = vld [vmem:[#allocation9 + $0x1a8] sm:$0xff]
    %v351 = vld [vmem:[#allocation9 + $0x1b0] sm:$0xff]
    %v352 = vld [vmem:[#allocation9 + $0x1b8] sm:$0xf]
    %v353 = vld [vmem:[#allocation9 + $0x1d4] sm:$0xff]
    %v354 = vld [vmem:[#allocation9 + $0x1dc] sm:$0xff]
    %v355 = vld [vmem:[#allocation9 + $0x1e4] sm:$0xff]
    %v356 = vld [vmem:[#allocation9 + $0x1ec] sm:$0xf]
    %v357 = vld [vmem:[#allocation9 + $0x208] sm:$0xff]
    %v358 = vld [vmem:[#allocation9 + $0x210] sm:$0xff]
    %v359 = vld [vmem:[#allocation9 + $0x218] sm:$0xff]
    %v360 = vld [vmem:[#allocation9 + $0x220] sm:$0xf]
    %v361 = vld [vmem:[#allocation9 + $0x23c] sm:$0xff]
    %v362 = vld [vmem:[#allocation9 + $0x244] sm:$0xff]
    %v363 = vld [vmem:[#allocation9 + $0x24c] sm:$0xff]
    %v364 = vld [vmem:[#allocation9 + $0x254] sm:$0xf]
    %v365 = vld [vmem:[#allocation9 + $0x270] sm:$0xff]
    %v366 = vld [vmem:[#allocation9 + $0x278] sm:$0xff]
    %v367 = vld [vmem:[#allocation9 + $0x280] sm:$0xff]
    %v368 = vld [vmem:[#allocation9 + $0x288] sm:$0xf]
    %v369 = vld [vmem:[#allocation9 + $0x2a4] sm:$0xff]
    %v370 = vld [vmem:[#allocation9 + $0x2ac] sm:$0xff]
    %v371 = vld [vmem:[#allocation9 + $0x2b4] sm:$0xff]
    %v372 = vld [vmem:[#allocation9 + $0x2bc] sm:$0xf]
    %v373 = vld [vmem:[#allocation9 + $0x2d8] sm:$0xff]
    %v374 = vld [vmem:[#allocation9 + $0x2e0] sm:$0xff]
    %v375 = vld [vmem:[#allocation9 + $0x2e8] sm:$0xff]
    %v376 = vld [vmem:[#allocation9 + $0x2f0] sm:$0xf]
    %v377 = vld [vmem:[#allocation9 + $0x30c] sm:$0xff]
    %v378 = vld [vmem:[#allocation9 + $0x314] sm:$0xff]
    %v379 = vld [vmem:[#allocation9 + $0x31c] sm:$0xff]
    %v380 = vld [vmem:[#allocation9 + $0x324] sm:$0xf]
    %v445 = vunpack.c.l.b16 %v317
    %v446 = vunpack.c.h.b16 %v317
    %v447 = vunpack.c.l.b16 %v318
    %v448 = vunpack.c.h.b16 %v318
    %v449 = vunpack.c.l.b16 %v319
    %v450 = vunpack.c.h.b16 %v319
    %v451 = vunpack.c.l.b16 %v320
    %v452 = vunpack.c.l.b16 %v321
    %v453 = vunpack.c.h.b16 %v321
    %v454 = vunpack.c.l.b16 %v322
    %v455 = vunpack.c.h.b16 %v322
    %v456 = vunpack.c.l.b16 %v323
    %v457 = vunpack.c.h.b16 %v323
    %v458 = vunpack.c.l.b16 %v324
    %v459 = vunpack.c.l.b16 %v325
    %v460 = vunpack.c.h.b16 %v325
    %v461 = vunpack.c.l.b16 %v326
    %v462 = vunpack.c.h.b16 %v326
    %v463 = vunpack.c.l.b16 %v327
    %v464 = vunpack.c.h.b16 %v327
    %v465 = vunpack.c.l.b16 %v328
    %v466 = vunpack.c.l.b16 %v329
    %v467 = vunpack.c.h.b16 %v329
    %v468 = vunpack.c.l.b16 %v330
    %v469 = vunpack.c.h.b16 %v330
    %v470 = vunpack.c.l.b16 %v331
    %v471 = vunpack.c.h.b16 %v331
    %v472 = vunpack.c.l.b16 %v332
    %v473 = vunpack.c.l.b16 %v333
    %v474 = vunpack.c.h.b16 %v333
    %v475 = vunpack.c.l.b16 %v334
    %v476 = vunpack.c.h.b16 %v334
    %v477 = vunpack.c.l.b16 %v335
    %v478 = vunpack.c.h.b16 %v335
    %v479 = vunpack.c.l.b16 %v336
    %v480 = vunpack.c.l.b16 %v337
    %v481 = vunpack.c.h.b16 %v337
    %v482 = vunpack.c.l.b16 %v338
    %v483 = vunpack.c.h.b16 %v338
    %v484 = vunpack.c.l.b16 %v339
    %v485 = vunpack.c.h.b16 %v339
    %v486 = vunpack.c.l.b16 %v340
    %v487 = vunpack.c.l.b16 %v341
    %v488 = vunpack.c.h.b16 %v341
    %v489 = vunpack.c.l.b16 %v342
    %v490 = vunpack.c.h.b16 %v342
    %v491 = vunpack.c.l.b16 %v343
    %v492 = vunpack.c.h.b16 %v343
    %v493 = vunpack.c.l.b16 %v344
    %v494 = vunpack.c.l.b16 %v345
    %v495 = vunpack.c.h.b16 %v345
    %v496 = vunpack.c.l.b16 %v346
    %v497 = vunpack.c.h.b16 %v346
    %v498 = vunpack.c.l.b16 %v347
    %v499 = vunpack.c.h.b16 %v347
    %v500 = vunpack.c.l.b16 %v348
    %v501 = vunpack.c.l.b16 %v349
    %v502 = vunpack.c.h.b16 %v349
    %v503 = vunpack.c.l.b16 %v350
    %v504 = vunpack.c.h.b16 %v350
    %v505 = vunpack.c.l.b16 %v351
    %v506 = vunpack.c.h.b16 %v351
    %v507 = vunpack.c.l.b16 %v352
    %v508 = vunpack.c.l.b16 %v353
    %v509 = vunpack.c.h.b16 %v353
    %v510 = vunpack.c.l.b16 %v354
    %v511 = vunpack.c.h.b16 %v354
    %v512 = vunpack.c.l.b16 %v355
    %v513 = vunpack.c.h.b16 %v355
    %v514 = vunpack.c.l.b16 %v356
    %v515 = vunpack.c.l.b16 %v357
    %v516 = vunpack.c.h.b16 %v357
    %v517 = vunpack.c.l.b16 %v358
    %v518 = vunpack.c.h.b16 %v358
    %v519 = vunpack.c.l.b16 %v359
    %v520 = vunpack.c.h.b16 %v359
    %v521 = vunpack.c.l.b16 %v360
    %v522 = vunpack.c.l.b16 %v361
    %v523 = vunpack.c.h.b16 %v361
    %v524 = vunpack.c.l.b16 %v362
    %v525 = vunpack.c.h.b16 %v362
    %v526 = vunpack.c.l.b16 %v363
    %v527 = vunpack.c.h.b16 %v363
    %v528 = vunpack.c.l.b16 %v364
    %v529 = vunpack.c.l.b16 %v365
    %v530 = vunpack.c.h.b16 %v365
    %v531 = vunpack.c.l.b16 %v366
    %v532 = vunpack.c.h.b16 %v366
    %v533 = vunpack.c.l.b16 %v367
    %v534 = vunpack.c.h.b16 %v367
    %v535 = vunpack.c.l.b16 %v368
    %v536 = vunpack.c.l.b16 %v369
    %v537 = vunpack.c.h.b16 %v369
    %v538 = vunpack.c.l.b16 %v370
    %v539 = vunpack.c.h.b16 %v370
    %v540 = vunpack.c.l.b16 %v371
    %v541 = vunpack.c.h.b16 %v371
    %v542 = vunpack.c.l.b16 %v372
    %v543 = vunpack.c.l.b16 %v373
    %v544 = vunpack.c.h.b16 %v373
    %v545 = vunpack.c.l.b16 %v374
    %v546 = vunpack.c.h.b16 %v374
    %v547 = vunpack.c.l.b16 %v375
    %v548 = vunpack.c.h.b16 %v375
    %v549 = vunpack.c.l.b16 %v376
    %v550 = vunpack.c.l.b16 %v377
    %v551 = vunpack.c.h.b16 %v377
    %v552 = vunpack.c.l.b16 %v378
    %v553 = vunpack.c.h.b16 %v378
    %v554 = vunpack.c.l.b16 %v379
    %v555 = vunpack.c.h.b16 %v379
    %v556 = vunpack.c.l.b16 %v380
    %v557 = vpack.c.b16 %v452, %v445
    %v558 = vpack.c.b16 %v453, %v446
    %v559 = vpack.c.b16 %v454, %v447
    %v560 = vpack.c.b16 %v455, %v448
    %v561 = vpack.c.b16 %v456, %v449
    %v562 = vpack.c.b16 %v457, %v450
    %v563 = vpack.c.b16 %v458, %v451
    %v564 = vpack.c.b16 %v466, %v459
    %v565 = vpack.c.b16 %v467, %v460
    %v566 = vpack.c.b16 %v468, %v461
    %v567 = vpack.c.b16 %v469, %v462
    %v568 = vpack.c.b16 %v470, %v463
    %v569 = vpack.c.b16 %v471, %v464
    %v570 = vpack.c.b16 %v472, %v465
    %v571 = vpack.c.b16 %v480, %v473
    %v572 = vpack.c.b16 %v481, %v474
    %v573 = vpack.c.b16 %v482, %v475
    %v574 = vpack.c.b16 %v483, %v476
    %v575 = vpack.c.b16 %v484, %v477
    %v576 = vpack.c.b16 %v485, %v478
    %v577 = vpack.c.b16 %v486, %v479
    %v578 = vpack.c.b16 %v494, %v487
    %v579 = vpack.c.b16 %v495, %v488
    %v580 = vpack.c.b16 %v496, %v489
    %v581 = vpack.c.b16 %v497, %v490
    %v582 = vpack.c.b16 %v498, %v491
    %v583 = vpack.c.b16 %v499, %v492
    %v584 = vpack.c.b16 %v500, %v493
    %v585 = vpack.c.b16 %v508, %v501
    %v586 = vpack.c.b16 %v509, %v502
    %v587 = vpack.c.b16 %v510, %v503
    %v588 = vpack.c.b16 %v511, %v504
    %v589 = vpack.c.b16 %v512, %v505
    %v590 = vpack.c.b16 %v513, %v506
    %v591 = vpack.c.b16 %v514, %v507
    %v592 = vpack.c.b16 %v522, %v515
    %v593 = vpack.c.b16 %v523, %v516
    %v594 = vpack.c.b16 %v524, %v517
    %v595 = vpack.c.b16 %v525, %v518
    %v596 = vpack.c.b16 %v526, %v519
    %v597 = vpack.c.b16 %v527, %v520
    %v598 = vpack.c.b16 %v528, %v521
    %v599 = vpack.c.b16 %v536, %v529
    %v600 = vpack.c.b16 %v537, %v530
    %v601 = vpack.c.b16 %v538, %v531
    %v602 = vpack.c.b16 %v539, %v532
    %v603 = vpack.c.b16 %v540, %v533
    %v604 = vpack.c.b16 %v541, %v534
    %v605 = vpack.c.b16 %v542, %v535
    %v606 = vpack.c.b16 %v550, %v543
    %v607 = vpack.c.b16 %v551, %v544
    %v608 = vpack.c.b16 %v552, %v545
    %v609 = vpack.c.b16 %v553, %v546
    %v610 = vpack.c.b16 %v554, %v547
    %v611 = vpack.c.b16 %v555, %v548
    %v612 = vpack.c.b16 %v556, %v549
    %669 = vmatprep.subr.bf16.mxu0 %v558
    %670 = vmatpush1.bf16.msra.mxu0 %v557
    %671 = vmatprep.subr.bf16.mxu0 %v565
    %672 = vmatpush1.bf16.msra.mxu0 %v564
    %673 = vmatprep.subr.bf16.mxu0 %v572
    %674 = vmatpush1.bf16.msra.mxu0 %v571
    %675 = vmatprep.subr.bf16.mxu0 %v579
    %676 = vmatpush1.bf16.msra.mxu0 %v578
    %677 = vmatprep.subr.bf16.mxu0 %v586
    %678 = vmatpush1.bf16.msra.mxu0 %v585
    %679 = vmatprep.subr.bf16.mxu0 %v593
    %680 = vmatpush1.bf16.msra.mxu0 %v592
    %681 = vmatprep.subr.bf16.mxu0 %v600
    %682 = vmatpush1.bf16.msra.mxu0 %v599
    %683 = vmatprep.subr.bf16.mxu0 %v607
    %684 = vmatpush1.bf16.msra.mxu0 %v606
    %685 = vmatprep.subr.bf16.mxu0 0
    %686 = vmatpush1.bf16.msra.mxu0 0
    %687 = vmatprep.subr.bf16.mxu0 0
    %688 = vmatpush1.bf16.msra.mxu0 0
    %689 = vmatprep.subr.bf16.mxu0 0
    %690 = vmatpush1.bf16.msra.mxu0 0
    %691 = vmatprep.subr.bf16.mxu0 0
    %692 = vmatpush1.bf16.msra.mxu0 0
    %693 = vmatprep.subr.bf16.mxu0 0
    %694 = vmatpush1.bf16.msra.mxu0 0
    %695 = vmatprep.subr.bf16.mxu0 0
    %696 = vmatpush1.bf16.msra.mxu0 0
    %697 = vmatprep.subr.bf16.mxu0 0
    %698 = vmatpush1.bf16.msra.mxu0 0
    %699 = vmatprep.subr.bf16.mxu0 0
    %700 = vmatpush1.bf16.msra.mxu0 0
    %701 = vmatprep.mubr.bf16.mxu0 0
    %702 = vmatmul.mubr.bf16.gmra.mrb[0].mxu0 %v316
    %v703 = vpop.f32.mrb[0].mxu0
    %v704 = vadd.f32 0.0, %v703
    %v705 = vpop.f32.mrb[0].mxu0
    %v706 = vadd.f32 0.0, %v705
    %v707 = vpop.f32.mrb[0].mxu0
    %v708 = vpop.f32.mrb[0].mxu0
    %709 = vdwg.mxu0
    %710 = vmatprep.subr.bf16.mxu0 %v560
    %711 = vmatpush1.bf16.msra.mxu0 %v559
    %712 = vmatprep.subr.bf16.mxu0 %v567
    %713 = vmatpush1.bf16.msra.mxu0 %v566
    %714 = vmatprep.subr.bf16.mxu0 %v574
    %715 = vmatpush1.bf16.msra.mxu0 %v573
    %716 = vmatprep.subr.bf16.mxu0 %v581
    %717 = vmatpush1.bf16.msra.mxu0 %v580
    %718 = vmatprep.subr.bf16.mxu0 %v588
    %719 = vmatpush1.bf16.msra.mxu0 %v587
    %720 = vmatprep.subr.bf16.mxu0 %v595
    %721 = vmatpush1.bf16.msra.mxu0 %v594
    %722 = vmatprep.subr.bf16.mxu0 %v602
    %723 = vmatpush1.bf16.msra.mxu0 %v601
    %724 = vmatprep.subr.bf16.mxu0 %v609
    %725 = vmatpush1.bf16.msra.mxu0 %v608
    %726 = vmatprep.subr.bf16.mxu0 0
    %727 = vmatpush1.bf16.msra.mxu0 0
    %728 = vmatprep.subr.bf16.mxu0 0
    %729 = vmatpush1.bf16.msra.mxu0 0
    %730 = vmatprep.subr.bf16.mxu0 0
    %731 = vmatpush1.bf16.msra.mxu0 0
    %732 = vmatprep.subr.bf16.mxu0 0
    %733 = vmatpush1.bf16.msra.mxu0 0
    %734 = vmatprep.subr.bf16.mxu0 0
    %735 = vmatpush1.bf16.msra.mxu0 0
    %736 = vmatprep.subr.bf16.mxu0 0
    %737 = vmatpush1.bf16.msra.mxu0 0
    %738 = vmatprep.subr.bf16.mxu0 0
    %739 = vmatpush1.bf16.msra.mxu0 0
    %740 = vmatprep.subr.bf16.mxu0 0
    %741 = vmatpush1.bf16.msra.mxu0 0
    %742 = vmatprep.mubr.bf16.mxu0 0
    %743 = vmatmul.mubr.bf16.gmra.mrb[0].mxu0 %v316
    %v744 = vpop.f32.mrb[0].mxu0
    %v745 = vadd.f32 0.0, %v744
    %v746 = vpop.f32.mrb[0].mxu0
    %v747 = vadd.f32 0.0, %v746
    %v748 = vpop.f32.mrb[0].mxu0
    %v749 = vpop.f32.mrb[0].mxu0
    %750 = vdwg.mxu0
    %751 = vmatprep.subr.bf16.mxu0 %v562
    %752 = vmatpush1.bf16.msra.mxu0 %v561
    %753 = vmatprep.subr.bf16.mxu0 %v569
    %754 = vmatpush1.bf16.msra.mxu0 %v568
    %755 = vmatprep.subr.bf16.mxu0 %v576
    %756 = vmatpush1.bf16.msra.mxu0 %v575
    %757 = vmatprep.subr.bf16.mxu0 %v583
    %758 = vmatpush1.bf16.msra.mxu0 %v582
    %759 = vmatprep.subr.bf16.mxu0 %v590
    %760 = vmatpush1.bf16.msra.mxu0 %v589
    %761 = vmatprep.subr.bf16.mxu0 %v597
    %762 = vmatpush1.bf16.msra.mxu0 %v596
    %763 = vmatprep.subr.bf16.mxu0 %v604
    %764 = vmatpush1.bf16.msra.mxu0 %v603
    %765 = vmatprep.subr.bf16.mxu0 %v611
    %766 = vmatpush1.bf16.msra.mxu0 %v610
    %767 = vmatprep.subr.bf16.mxu0 0
    %768 = vmatpush1.bf16.msra.mxu0 0
    %769 = vmatprep.subr.bf16.mxu0 0
    %770 = vmatpush1.bf16.msra.mxu0 0
    %771 = vmatprep.subr.bf16.mxu0 0
    %772 = vmatpush1.bf16.msra.mxu0 0
    %773 = vmatprep.subr.bf16.mxu0 0
    %774 = vmatpush1.bf16.msra.mxu0 0
    %775 = vmatprep.subr.bf16.mxu0 0
    %776 = vmatpush1.bf16.msra.mxu0 0
    %777 = vmatprep.subr.bf16.mxu0 0
    %778 = vmatpush1.bf16.msra.mxu0 0
    %779 = vmatprep.subr.bf16.mxu0 0
    %780 = vmatpush1.bf16.msra.mxu0 0
    %781 = vmatprep.subr.bf16.mxu0 0
    %782 = vmatpush1.bf16.msra.mxu0 0
    %783 = vmatprep.mubr.bf16.mxu0 0
    %784 = vmatmul.mubr.bf16.gmra.mrb[0].mxu0 %v316
    %v785 = vpop.f32.mrb[0].mxu0
    %v786 = vadd.f32 0.0, %v785
    %v787 = vpop.f32.mrb[0].mxu0
    %v788 = vadd.f32 0.0, %v787
    %v789 = vpop.f32.mrb[0].mxu0
    %v790 = vpop.f32.mrb[0].mxu0
    %791 = vdwg.mxu0
    %792 = vmatprep.subr.bf16.mxu0 0
    %793 = vmatpush1.bf16.msra.mxu0 %v563
    %794 = vmatprep.subr.bf16.mxu0 0
    %795 = vmatpush1.bf16.msra.mxu0 %v570
    %796 = vmatprep.subr.bf16.mxu0 0
    %797 = vmatpush1.bf16.msra.mxu0 %v577
    %798 = vmatprep.subr.bf16.mxu0 0
    %799 = vmatpush1.bf16.msra.mxu0 %v584
    %800 = vmatprep.subr.bf16.mxu0 0
    %801 = vmatpush1.bf16.msra.mxu0 %v591
    %802 = vmatprep.subr.bf16.mxu0 0
    %803 = vmatpush1.bf16.msra.mxu0 %v598
    %804 = vmatprep.subr.bf16.mxu0 0
    %805 = vmatpush1.bf16.msra.mxu0 %v605
    %806 = vmatprep.subr.bf16.mxu0 0
    %807 = vmatpush1.bf16.msra.mxu0 %v612
    %808 = vmatprep.subr.bf16.mxu0 0
    %809 = vmatpush1.bf16.msra.mxu0 0
    %810 = vmatprep.subr.bf16.mxu0 0
    %811 = vmatpush1.bf16.msra.mxu0 0
    %812 = vmatprep.subr.bf16.mxu0 0
    %813 = vmatpush1.bf16.msra.mxu0 0
    %814 = vmatprep.subr.bf16.mxu0 0
    %815 = vmatpush1.bf16.msra.mxu0 0
    %816 = vmatprep.subr.bf16.mxu0 0
    %817 = vmatpush1.bf16.msra.mxu0 0
    %818 = vmatprep.subr.bf16.mxu0 0
    %819 = vmatpush1.bf16.msra.mxu0 0
    %820 = vmatprep.subr.bf16.mxu0 0
    %821 = vmatpush1.bf16.msra.mxu0 0
    %822 = vmatprep.subr.bf16.mxu0 0
    %823 = vmatpush1.bf16.msra.mxu0 0
    %824 = vmatprep.mubr.bf16.mxu0 0
    %825 = vmatmul.mubr.bf16.gmra.mrb[0].mxu0 %v316
    %v826 = vpop.f32.mrb[0].mxu0
    %v827 = vadd.f32 0.0, %v826
    %v828 = vpop.f32.mrb[0].mxu0
    %v829 = vpop.f32.mrb[0].mxu0
    %v830 = vpop.f32.mrb[0].mxu0
    %831 = vdwg.mxu0
    %v833 = vrot.slane %v745, 1
    %v835 = vadd.f32 %v704, %v833
    %v836 = vld [vmem:[%s4] sm:$0x1]
    %v837 = vadd.f32 %v835, %v836
    %v838 = vlaneseq
    %v839 = vand.u32 %v838, 127
    %vm840 = vcmp.lt.s32.totalorder %v839, 8
    %v841 = vsel %vm840, %v837, -inf
    %v842 = vsel %vm314, %v841, -inf
    %843 = vmax.xlane.f32.xlu0 %v842
    %v844 = vpop.xlane.xlu0 %843
    %v845 = vsub.f32 %v841, %v844
    %v846 = vmul.f32 %v845, 1.442695
    %v847 = vpow.pop %v846
    %v848 = vsel %vm314, %v847, 0.0
    %849 = vadd.xlane.f32.xlu0 %v848
    %v850 = vpop.xlane.xlu0 %849
    %v851 = vrcp.pop %v850
    %v852 = vmul.f32 %v847, %v851
    %s853 = smul.u32 0, 4
    %s854 = scalar_lea.vmem [#allocation10], %s853
    %v855 = vlaneseq
    %vm856 = vcmp.ge.s32.totalorder %v855, 0
    %vm857 = vcmp.lt.s32.totalorder %v855, 128
    %vm858 = vmand %vm856, %vm857
    %859 = vst.msk [vmem:[%s854 + $0x3] sm:$0x1] %vm858, %v852
    %v860 = vpack.c.bf16 %v852, %v852
    %v861 = vld [vmem:[#allocation3] sm:$0xff]
    %v862 = vld [vmem:[#allocation3 + $0x8] sm:$0xff]
    %v863 = vld [vmem:[#allocation3 + $0x10] sm:$0xff]
    %v864 = vld [vmem:[#allocation3 + $0x18] sm:$0xff]
    %v865 = vld [vmem:[#allocation3 + $0x20] sm:$0xff]
    %v866 = vld [vmem:[#allocation3 + $0x28] sm:$0xff]
    %v867 = vld [vmem:[#allocation3 + $0x30] sm:$0xff]
    %v868 = vld [vmem:[#allocation3 + $0x38] sm:$0xff]
    %869 = vmatprep.subr.bf16.mxu0 0
    %870 = vmatpush1.bf16.msra.mxu0 %v861
    %871 = vmatprep.subr.bf16.mxu0 0
    %872 = vmatpush1.bf16.msra.mxu0 %v862
    %873 = vmatprep.subr.bf16.mxu0 0
    %874 = vmatpush1.bf16.msra.mxu0 %v863
    %875 = vmatprep.subr.bf16.mxu0 0
    %876 = vmatpush1.bf16.msra.mxu0 %v864
    %877 = vmatprep.subr.bf16.mxu0 0
    %878 = vmatpush1.bf16.msra.mxu0 %v865
    %879 = vmatprep.subr.bf16.mxu0 0
    %880 = vmatpush1.bf16.msra.mxu0 %v866
    %881 = vmatprep.subr.bf16.mxu0 0
    %882 = vmatpush1.bf16.msra.mxu0 %v867
    %883 = vmatprep.subr.bf16.mxu0 0
    %884 = vmatpush1.bf16.msra.mxu0 %v868
    %885 = vmatprep.subr.bf16.mxu0 0
    %886 = vmatpush1.bf16.msra.mxu0 0
    %887 = vmatprep.subr.bf16.mxu0 0
    %888 = vmatpush1.bf16.msra.mxu0 0
    %889 = vmatprep.subr.bf16.mxu0 0
    %890 = vmatpush1.bf16.msra.mxu0 0
    %891 = vmatprep.subr.bf16.mxu0 0
    %892 = vmatpush1.bf16.msra.mxu0 0
    %893 = vmatprep.subr.bf16.mxu0 0
    %894 = vmatpush1.bf16.msra.mxu0 0
    %895 = vmatprep.subr.bf16.mxu0 0
    %896 = vmatpush1.bf16.msra.mxu0 0
    %897 = vmatprep.subr.bf16.mxu0 0
    %898 = vmatpush1.bf16.msra.mxu0 0
    %899 = vmatprep.subr.bf16.mxu0 0
    %900 = vmatpush1.bf16.msra.mxu0 0
    %901 = vmatprep.mubr.bf16.mxu0 0
    %902 = vmatmul.mubr.bf16.gmra.mrb[0].mxu0 %v860
    %v903 = vpop.f32.mrb[0].mxu0
    %v904 = vadd.f32 0.0, %v903
    %v905 = vpop.f32.mrb[0].mxu0
    %v906 = vpop.f32.mrb[0].mxu0
    %v907 = vpop.f32.mrb[0].mxu0
    %908 = vdwg.mxu0
    %v909 = vadd.f32 %v706, %v904
    %v910 = vld [vmem:[%s4 + $0x1] sm:$0x1]
    %v911 = vadd.f32 %v909, %v910
    %v912 = vmax.f32 %v911, 0.0
    %v913 = vpack.c.bf16 %v912, %v912
    %v914 = vld [vmem:[#allocation9 + $0x20] sm:$0xff]
    %v915 = vld [vmem:[#allocation9 + $0x28] sm:$0xff]
    %v916 = vld [vmem:[#allocation9 + $0x54] sm:$0xff]
    %v917 = vld [vmem:[#allocation9 + $0x5c] sm:$0xff]
    %v918 = vld [vmem:[#allocation9 + $0x88] sm:$0xff]
    %v919 = vld [vmem:[#allocation9 + $0x90] sm:$0xff]
    %v920 = vld [vmem:[#allocation9 + $0xbc] sm:$0xff]
    %v921 = vld [vmem:[#allocation9 + $0xc4] sm:$0xff]
    %v922 = vld [vmem:[#allocation9 + $0xf0] sm:$0xff]
    %v923 = vld [vmem:[#allocation9 + $0xf8] sm:$0xff]
    %v924 = vld [vmem:[#allocation9 + $0x124] sm:$0xff]
    %v925 = vld [vmem:[#allocation9 + $0x12c] sm:$0xff]
    %v926 = vld [vmem:[#allocation9 + $0x158] sm:$0xff]
    %v927 = vld [vmem:[#allocation9 + $0x160] sm:$0xff]
    %v928 = vld [vmem:[#allocation9 + $0x18c] sm:$0xff]
    %v929 = vld [vmem:[#allocation9 + $0x194] sm:$0xff]
    %v930 = vld [vmem:[#allocation9 + $0x1c0] sm:$0xff]
    %v931 = vld [vmem:[#allocation9 + $0x1c8] sm:$0xff]
    %v932 = vld [vmem:[#allocation9 + $0x1f4] sm:$0xff]
    %v933 = vld [vmem:[#allocation9 + $0x1fc] sm:$0xff]
    %v934 = vld [vmem:[#allocation9 + $0x228] sm:$0xff]
    %v935 = vld [vmem:[#allocation9 + $0x230] sm:$0xff]
    %v936 = vld [vmem:[#allocation9 + $0x25c] sm:$0xff]
    %v937 = vld [vmem:[#allocation9 + $0x264] sm:$0xff]
    %v938 = vld [vmem:[#allocation9 + $0x290] sm:$0xff]
    %v939 = vld [vmem:[#allocation9 + $0x298] sm:$0xff]
    %v940 = vld [vmem:[#allocation9 + $0x2c4] sm:$0xff]
    %v941 = vld [vmem:[#allocation9 + $0x2cc] sm:$0xff]
    %v942 = vld [vmem:[#allocation9 + $0x2f8] sm:$0xff]
    %v943 = vld [vmem:[#allocation9 + $0x300] sm:$0xff]
    %v944 = vld [vmem:[#allocation9 + $0x32c] sm:$0xff]
    %v945 = vld [vmem:[#allocation9 + $0x334] sm:$0xff]
    %v978 = vunpack.c.l.b16 %v914
    %v979 = vunpack.c.h.b16 %v914
    %v980 = vunpack.c.l.b16 %v915
    %v981 = vunpack.c.h.b16 %v915
    %v982 = vunpack.c.l.b16 %v916
    %v983 = vunpack.c.h.b16 %v916
    %v984 = vunpack.c.l.b16 %v917
    %v985 = vunpack.c.h.b16 %v917
    %v986 = vunpack.c.l.b16 %v918
    %v987 = vunpack.c.h.b16 %v918
    %v988 = vunpack.c.l.b16 %v919
    %v989 = vunpack.c.h.b16 %v919
    %v990 = vunpack.c.l.b16 %v920
    %v991 = vunpack.c.h.b16 %v920
    %v992 = vunpack.c.l.b16 %v921
    %v993 = vunpack.c.h.b16 %v921
    %v994 = vunpack.c.l.b16 %v922
    %v995 = vunpack.c.h.b16 %v922
    %v996 = vunpack.c.l.b16 %v923
    %v997 = vunpack.c.h.b16 %v923
    %v998 = vunpack.c.l.b16 %v924
    %v999 = vunpack.c.h.b16 %v924
    %v1000 = vunpack.c.l.b16 %v925
    %v1001 = vunpack.c.h.b16 %v925
    %v1002 = vunpack.c.l.b16 %v926
    %v1003 = vunpack.c.h.b16 %v926
    %v1004 = vunpack.c.l.b16 %v927
    %v1005 = vunpack.c.h.b16 %v927
    %v1006 = vunpack.c.l.b16 %v928
    %v1007 = vunpack.c.h.b16 %v928
    %v1008 = vunpack.c.l.b16 %v929
    %v1009 = vunpack.c.h.b16 %v929
    %v1010 = vunpack.c.l.b16 %v930
    %v1011 = vunpack.c.h.b16 %v930
    %v1012 = vunpack.c.l.b16 %v931
    %v1013 = vunpack.c.h.b16 %v931
    %v1014 = vunpack.c.l.b16 %v932
    %v1015 = vunpack.c.h.b16 %v932
    %v1016 = vunpack.c.l.b16 %v933
    %v1017 = vunpack.c.h.b16 %v933
    %v1018 = vunpack.c.l.b16 %v934
    %v1019 = vunpack.c.h.b16 %v934
    %v1020 = vunpack.c.l.b16 %v935
    %v1021 = vunpack.c.h.b16 %v935
    %v1022 = vunpack.c.l.b16 %v936
    %v1023 = vunpack.c.h.b16 %v936
    %v1024 = vunpack.c.l.b16 %v937
    %v1025 = vunpack.c.h.b16 %v937
    %v1026 = vunpack.c.l.b16 %v938
    %v1027 = vunpack.c.h.b16 %v938
    %v1028 = vunpack.c.l.b16 %v939
    %v1029 = vunpack.c.h.b16 %v939
    %v1030 = vunpack.c.l.b16 %v940
    %v1031 = vunpack.c.h.b16 %v940
    %v1032 = vunpack.c.l.b16 %v941
    %v1033 = vunpack.c.h.b16 %v941
    %v1034 = vunpack.c.l.b16 %v942
    %v1035 = vunpack.c.h.b16 %v942
    %v1036 = vunpack.c.l.b16 %v943
    %v1037 = vunpack.c.h.b16 %v943
    %v1038 = vunpack.c.l.b16 %v944
    %v1039 = vunpack.c.h.b16 %v944
    %v1040 = vunpack.c.l.b16 %v945
    %v1041 = vunpack.c.h.b16 %v945
    %v1042 = vpack.c.b16 %v982, %v978
    %v1043 = vpack.c.b16 %v983, %v979
    %v1044 = vpack.c.b16 %v984, %v980
    %v1045 = vpack.c.b16 %v985, %v981
    %v1046 = vpack.c.b16 %v990, %v986
    %v1047 = vpack.c.b16 %v991, %v987
    %v1048 = vpack.c.b16 %v992, %v988
    %v1049 = vpack.c.b16 %v993, %v989
    %v1050 = vpack.c.b16 %v998, %v994
    %v1051 = vpack.c.b16 %v999, %v995
    %v1052 = vpack.c.b16 %v1000, %v996
    %v1053 = vpack.c.b16 %v1001, %v997
    %v1054 = vpack.c.b16 %v1006, %v1002
    %v1055 = vpack.c.b16 %v1007, %v1003
    %v1056 = vpack.c.b16 %v1008, %v1004
    %v1057 = vpack.c.b16 %v1009, %v1005
    %v1058 = vpack.c.b16 %v1014, %v1010
    %v1059 = vpack.c.b16 %v1015, %v1011
    %v1060 = vpack.c.b16 %v1016, %v1012
    %v1061 = vpack.c.b16 %v1017, %v1013
    %v1062 = vpack.c.b16 %v1022, %v1018
    %v1063 = vpack.c.b16 %v1023, %v1019
    %v1064 = vpack.c.b16 %v1024, %v1020
    %v1065 = vpack.c.b16 %v1025, %v1021
    %v1066 = vpack.c.b16 %v1030, %v1026
    %v1067 = vpack.c.b16 %v1031, %v1027
    %v1068 = vpack.c.b16 %v1032, %v1028
    %v1069 = vpack.c.b16 %v1033, %v1029
    %v1070 = vpack.c.b16 %v1038, %v1034
    %v1071 = vpack.c.b16 %v1039, %v1035
    %v1072 = vpack.c.b16 %v1040, %v1036
    %v1073 = vpack.c.b16 %v1041, %v1037
    %1106 = vmatprep.subr.bf16.mxu0 %v1043
    %1107 = vmatpush1.bf16.msra.mxu0 %v1042
    %1108 = vmatprep.subr.bf16.mxu0 %v1047
    %1109 = vmatpush1.bf16.msra.mxu0 %v1046
    %1110 = vmatprep.subr.bf16.mxu0 %v1051
    %1111 = vmatpush1.bf16.msra.mxu0 %v1050
    %1112 = vmatprep.subr.bf16.mxu0 %v1055
    %1113 = vmatpush1.bf16.msra.mxu0 %v1054
    %1114 = vmatprep.subr.bf16.mxu0 %v1059
    %1115 = vmatpush1.bf16.msra.mxu0 %v1058
    %1116 = vmatprep.subr.bf16.mxu0 %v1063
    %1117 = vmatpush1.bf16.msra.mxu0 %v1062
    %1118 = vmatprep.subr.bf16.mxu0 %v1067
    %1119 = vmatpush1.bf16.msra.mxu0 %v1066
    %1120 = vmatprep.subr.bf16.mxu0 %v1071
    %1121 = vmatpush1.bf16.msra.mxu0 %v1070
    %1122 = vmatprep.subr.bf16.mxu0 0
    %1123 = vmatpush1.bf16.msra.mxu0 0
    %1124 = vmatprep.subr.bf16.mxu0 0
    %1125 = vmatpush1.bf16.msra.mxu0 0
    %1126 = vmatprep.subr.bf16.mxu0 0
    %1127 = vmatpush1.bf16.msra.mxu0 0
    %1128 = vmatprep.subr.bf16.mxu0 0
    %1129 = vmatpush1.bf16.msra.mxu0 0
    %1130 = vmatprep.subr.bf16.mxu0 0
    %1131 = vmatpush1.bf16.msra.mxu0 0
    %1132 = vmatprep.subr.bf16.mxu0 0
    %1133 = vmatpush1.bf16.msra.mxu0 0
    %1134 = vmatprep.subr.bf16.mxu0 0
    %1135 = vmatpush1.bf16.msra.mxu0 0
    %1136 = vmatprep.subr.bf16.mxu0 0
    %1137 = vmatpush1.bf16.msra.mxu0 0
    %1138 = vmatprep.mubr.bf16.mxu0 0
    %1139 = vmatmul.mubr.bf16.gmra.mrb[0].mxu0 %v913
    %v1140 = vpop.f32.mrb[0].mxu0
    %v1141 = vadd.f32 0.0, %v1140
    %v1142 = vpop.f32.mrb[0].mxu0
    %v1143 = vadd.f32 0.0, %v1142
    %v1144 = vpop.f32.mrb[0].mxu0
    %v1145 = vpop.f32.mrb[0].mxu0
    %1146 = vdwg.mxu0
    %1147 = vmatprep.subr.bf16.mxu0 %v1045
    %1148 = vmatpush1.bf16.msra.mxu0 %v1044
    %1149 = vmatprep.subr.bf16.mxu0 %v1049
    %1150 = vmatpush1.bf16.msra.mxu0 %v1048
    %1151 = vmatprep.subr.bf16.mxu0 %v1053
    %1152 = vmatpush1.bf16.msra.mxu0 %v1052
    %1153 = vmatprep.subr.bf16.mxu0 %v1057
    %1154 = vmatpush1.bf16.msra.mxu0 %v1056
    %1155 = vmatprep.subr.bf16.mxu0 %v1061
    %1156 = vmatpush1.bf16.msra.mxu0 %v1060
    %1157 = vmatprep.subr.bf16.mxu0 %v1065
    %1158 = vmatpush1.bf16.msra.mxu0 %v1064
    %1159 = vmatprep.subr.bf16.mxu0 %v1069
    %1160 = vmatpush1.bf16.msra.mxu0 %v1068
    %1161 = vmatprep.subr.bf16.mxu0 %v1073
    %1162 = vmatpush1.bf16.msra.mxu0 %v1072
    %1163 = vmatprep.subr.bf16.mxu0 0
    %1164 = vmatpush1.bf16.msra.mxu0 0
    %1165 = vmatprep.subr.bf16.mxu0 0
    %1166 = vmatpush1.bf16.msra.mxu0 0
    %1167 = vmatprep.subr.bf16.mxu0 0
    %1168 = vmatpush1.bf16.msra.mxu0 0
    %1169 = vmatprep.subr.bf16.mxu0 0
    %1170 = vmatpush1.bf16.msra.mxu0 0
    %1171 = vmatprep.subr.bf16.mxu0 0
    %1172 = vmatpush1.bf16.msra.mxu0 0
    %1173 = vmatprep.subr.bf16.mxu0 0
    %1174 = vmatpush1.bf16.msra.mxu0 0
    %1175 = vmatprep.subr.bf16.mxu0 0
    %1176 = vmatpush1.bf16.msra.mxu0 0
    %1177 = vmatprep.subr.bf16.mxu0 0
    %1178 = vmatpush1.bf16.msra.mxu0 0
    %1179 = vmatprep.mubr.bf16.mxu0 0
    %1180 = vmatmul.mubr.bf16.gmra.mrb[0].mxu0 %v913
    %v1181 = vpop.f32.mrb[0].mxu0
    %v1182 = vadd.f32 0.0, %v1181
    %v1183 = vpop.f32.mrb[0].mxu0
    %v1184 = vadd.f32 0.0, %v1183
    %v1185 = vpop.f32.mrb[0].mxu0
    %v1186 = vpop.f32.mrb[0].mxu0
    %1187 = vdwg.mxu0
    %v1192 = vrot.slane %v1141, 7
    %v1193 = vrot.slane %v1143, 7
    %v1194 = vrot.slane %v1182, 7
    %v1195 = vrot.slane %v1184, 7
    %v1200 = vadd.f32 %v747, %v1192
    %v1201 = vadd.f32 %v786, %v1193
    %v1202 = vadd.f32 %v788, %v1194
    %v1203 = vadd.f32 %v827, %v1195
    %v1204 = vld [vmem:[%s4 + $0x2] sm:$0xf]
    %v1206 = vlaneseq
    %v1207 = vshrl.u32 %v1206, 7
    %v1208 = vsub.s32 0, %v1207
    %v1209 = vrot.slane %v1204, %v1208
    %v1210 = vlaneseq
    %v1211 = vshrl.u32 %v1210, 7
    %v1212 = vsub.s32 1, %v1211
    %v1213 = vrot.slane %v1204, %v1212
    %v1214 = vlaneseq
    %v1215 = vshrl.u32 %v1214, 7
    %v1216 = vsub.s32 2, %v1215
    %v1217 = vrot.slane %v1204, %v1216
    %v1218 = vlaneseq
    %v1219 = vshrl.u32 %v1218, 7
    %v1220 = vsub.s32 3, %v1219
    %v1221 = vrot.slane %v1204, %v1220
    %v1226 = vadd.f32 %v1200, %v1209
    %v1227 = vadd.f32 %v1201, %v1213
    %v1228 = vadd.f32 %v1202, %v1217
    %v1229 = vadd.f32 %v1203, %v1221
    %v1230 = vxor.u32 %v1226, 2147483648
    %v1231 = vmul.f32 %v1230, 1.442695
    %v1232 = vpow.pop %v1231
    %v1233 = vadd.f32 %v1232, 1.0
    %v1234 = vrcp.pop %v1233
    %v1235 = vmul.f32 1.0, %v1234
    %v1236 = vxor.u32 %v1227, 2147483648
    %v1237 = vmul.f32 %v1236, 1.442695
    %v1238 = vpow.pop %v1237
    %v1239 = vadd.f32 %v1238, 1.0
    %v1240 = vrcp.pop %v1239
    %v1241 = vmul.f32 1.0, %v1240
    %v1242 = vtanh.pop %v1228
    %v1243 = vxor.u32 %v1229, 2147483648
    %v1244 = vmul.f32 %v1243, 1.442695
    %v1245 = vpow.pop %v1244
    %v1246 = vadd.f32 %v1245, 1.0
    %v1247 = vrcp.pop %v1246
    %v1248 = vmul.f32 1.0, %v1247
    %v1250 = vrot.slane %v310, 7
    %v1252 = vmul.f32 %v1241, %v1250
    %v1253 = vmul.f32 %v1235, %v1242
    %v1254 = vadd.f32 %v1252, %v1253
    %v1255 = vtanh.pop %v1254
    %v1256 = vmul.f32 %v1248, %v1255
    %1257 = vst [vmem:[#allocation2 - $0x1] sm:$0x2] %v1256
    %1258 = vst [vmem:[#allocation2] sm:$0x2] %v1254
    %v1261 = vunpack.c.l.s4 1966171168
    %v1262 = vunpack.c.0.s8 %v1261
    %v1263 = vlaneseq
    %v1264 = vshrl.u32 %v1263, 7
    %v1265 = vsub.s32 %v1262, %v1264
    %v1266 = vrot.slane %v1256, %v1265
    %v1267 = vcombine.high %v1266, %v1266
    %v1269 = vunpack.c.l.s4 1966171168
    %v1270 = vunpack.c.0.s8 %v1269
    %v1271 = vlaneseq
    %v1272 = vshrl.u32 %v1271, 7
    %v1273 = vsub.s32 %v1270, %v1272
    %v1274 = vrot.slane %v1267, %v1273
    %1276 = vst.msk [vmem:[%s854 + $0x1] sm:$0x1] %vm858, %v1274
    %v1279 = vunpack.c.l.s4 1966171168
    %v1280 = vunpack.c.0.s8 %v1279
    %v1281 = vlaneseq
    %v1282 = vshrl.u32 %v1281, 7
    %v1283 = vsub.s32 %v1280, %v1282
    %v1284 = vrot.slane %v1254, %v1283
    %v1285 = vcombine.high %v1284, %v1284
    %v1287 = vunpack.c.l.s4 1966171168
    %v1288 = vunpack.c.0.s8 %v1287
    %v1289 = vlaneseq
    %v1290 = vshrl.u32 %v1289, 7
    %v1291 = vsub.s32 %v1288, %v1290
    %v1292 = vrot.slane %v1285, %v1291
    %1294 = vst.msk [vmem:[%s854 + $0x2] sm:$0x1] %vm858, %v1292
    %v1295 = vpack.c.bf16 %v1256, %v1256
    %v1296 = vld [vmem:[#allocation9 + $0x30] sm:$0xf]
    %v1297 = vld [vmem:[#allocation9 + $0x64] sm:$0xf]
    %v1298 = vld [vmem:[#allocation9 + $0x98] sm:$0xf]
    %v1299 = vld [vmem:[#allocation9 + $0xcc] sm:$0xf]
    %v1300 = vld [vmem:[#allocation9 + $0x100] sm:$0xf]
    %v1301 = vld [vmem:[#allocation9 + $0x134] sm:$0xf]
    %v1302 = vld [vmem:[#allocation9 + $0x168] sm:$0xf]
    %v1303 = vld [vmem:[#allocation9 + $0x19c] sm:$0xf]
    %v1304 = vld [vmem:[#allocation9 + $0x1d0] sm:$0xf]
    %v1305 = vld [vmem:[#allocation9 + $0x204] sm:$0xf]
    %v1306 = vld [vmem:[#allocation9 + $0x238] sm:$0xf]
    %v1307 = vld [vmem:[#allocation9 + $0x26c] sm:$0xf]
    %v1308 = vld [vmem:[#allocation9 + $0x2a0] sm:$0xf]
    %v1309 = vld [vmem:[#allocation9 + $0x2d4] sm:$0xf]
    %v1310 = vld [vmem:[#allocation9 + $0x308] sm:$0xf]
    %v1311 = vld [vmem:[#allocation9 + $0x33c] sm:$0xf]
    %v1312 = vld [vmem:[%s4 + $0x6] sm:$0x1]
    %v1314 = vshrl.u32 %v1295, 16
    %v1333 = vunpack.c.l.b16 %v1296
    %v1334 = vunpack.c.l.b16 %v1297
    %v1335 = vunpack.c.l.b16 %v1298
    %v1336 = vunpack.c.l.b16 %v1299
    %v1337 = vunpack.c.l.b16 %v1300
    %v1338 = vunpack.c.l.b16 %v1301
    %v1339 = vunpack.c.l.b16 %v1302
    %v1340 = vunpack.c.l.b16 %v1303
    %v1341 = vunpack.c.l.b16 %v1304
    %v1342 = vunpack.c.l.b16 %v1305
    %v1343 = vunpack.c.l.b16 %v1306
    %v1344 = vunpack.c.l.b16 %v1307
    %v1345 = vunpack.c.l.b16 %v1308
    %v1346 = vunpack.c.l.b16 %v1309
    %v1347 = vunpack.c.l.b16 %v1310
    %v1348 = vunpack.c.l.b16 %v1311
    %v1349 = vpack.c.b16 %v1334, %v1333
    %v1350 = vpack.c.b16 %v1336, %v1335
    %v1351 = vpack.c.b16 %v1338, %v1337
    %v1352 = vpack.c.b16 %v1340, %v1339
    %v1353 = vpack.c.b16 %v1342, %v1341
    %v1354 = vpack.c.b16 %v1344, %v1343
    %v1355 = vpack.c.b16 %v1346, %v1345
    %v1356 = vpack.c.b16 %v1348, %v1347
    %1365 = vmatprep.subr.bf16.mxu0 0
    %1366 = vmatpush1.bf16.msra.mxu0 %v1349
    %1367 = vmatprep.subr.bf16.mxu0 0
    %1368 = vmatpush1.bf16.msra.mxu0 %v1350
    %1369 = vmatprep.subr.bf16.mxu0 0
    %1370 = vmatpush1.bf16.msra.mxu0 %v1351
    %1371 = vmatprep.subr.bf16.mxu0 0
    %1372 = vmatpush1.bf16.msra.mxu0 %v1352
    %1373 = vmatprep.subr.bf16.mxu0 0
    %1374 = vmatpush1.bf16.msra.mxu0 %v1353
    %1375 = vmatprep.subr.bf16.mxu0 0
    %1376 = vmatpush1.bf16.msra.mxu0 %v1354
    %1377 = vmatprep.subr.bf16.mxu0 0
    %1378 = vmatpush1.bf16.msra.mxu0 %v1355
    %1379 = vmatprep.subr.bf16.mxu0 0
    %1380 = vmatpush1.bf16.msra.mxu0 %v1356
    %1381 = vmatprep.subr.bf16.mxu0 0
    %1382 = vmatpush1.bf16.msra.mxu0 0
    %1383 = vmatprep.subr.bf16.mxu0 0
    %1384 = vmatpush1.bf16.msra.mxu0 0
    %1385 = vmatprep.subr.bf16.mxu0 0
    %1386 = vmatpush1.bf16.msra.mxu0 0
    %1387 = vmatprep.subr.bf16.mxu0 0
    %1388 = vmatpush1.bf16.msra.mxu0 0
    %1389 = vmatprep.subr.bf16.mxu0 0
    %1390 = vmatpush1.bf16.msra.mxu0 0
    %1391 = vmatprep.subr.bf16.mxu0 0
    %1392 = vmatpush1.bf16.msra.mxu0 0
    %1393 = vmatprep.subr.bf16.mxu0 0
    %1394 = vmatpush1.bf16.msra.mxu0 0
    %1395 = vmatprep.subr.bf16.mxu0 0
    %1396 = vmatpush1.bf16.msra.mxu0 0
    %1397 = vmatprep.mubr.bf16.mxu0 0
    %1398 = vmatmul.mubr.bf16.gmra.mrb[0].mxu0 %v1314
    %v1399 = vpop.f32.mrb[0].mxu0
    %v1400 = vadd.f32 %v1312, %v1399
    %v1401 = vpop.f32.mrb[0].mxu0
    %v1402 = vpop.f32.mrb[0].mxu0
    %v1403 = vpop.f32.mrb[0].mxu0
    %1404 = vdwg.mxu0
    %vm1405 = vcmp.lt.s32.totalorder %v839, 64
    %v1406 = vsel %vm1405, %v1400, -inf
    %v1407 = vsel %vm314, %v1406, -inf
    %1408 = vmax.xlane.f32.xlu0 %v1407
    %v1409 = vpop.xlane.xlu0 %1408
    %v1410 = vsub.f32 %v1406, %v1409
    %v1411 = vmul.f32 %v1410, 1.442695
    %v1412 = vpow.pop %v1411
    %v1413 = vsel %vm314, %v1412, 0.0
    %1414 = vadd.xlane.f32.xlu0 %v1413
    %v1415 = vpop.xlane.xlu0 %1414
    %v1416 = vlog2.pop %v1415
    %v1417 = vmul.f32 %v1416, 0.6931472
    %v1418 = vsub.f32 %v1410, %v1417
    %v1419 = vsel %vm1405, %v1418, 0.0
    %1420 = vst.msk [vmem:[%s854] sm:$0x1] %vm858, %v1419
    // Predicated region
    $region38: #{tpu_custom_call.1} parent=1 // pred_check
      _
    $region39: #{tpu_custom_call.1} parent=1 // pred_check_branch
      %1422 = sbr.rel (0) target = $region41
    $region40: #{tpu_custom_call.1} parent=1 // pred_region
      %s1424 = ssub.s32 64, 64
      %1425 = vsyncadd [#allocation6], %s1424
      %s1427 = sshll.u32 [#allocation10], 4
      %s1428 = int_to_ptr.vmem [resolvable:$true] %s1427
      %1430 = dma.vmem_to_hbm [thread:$0]  %s1428, 64, %s5, [#allocation6]
    $region41: #{tpu_custom_call.1} parent=1 // pred_fallthru
      _
    // Predicated region
    $region42: #{tpu_custom_call.1} parent=1 // pred_check
      _
    $region43: #{tpu_custom_call.1} parent=1 // pred_check_branch
      %1432 = sbr.rel (0) target = $region45
    $region44: #{tpu_custom_call.1} parent=1 // pred_region
      %1433 = dma.done [#allocation6], 64
    $region45: #{tpu_custom_call.1} parent=1 // pred_fallthru
      _
    %1434 = vsyncpa [#allocation5], 1
    %1435 = vsyncpa [#allocation8], 1
    %1436 = vsyncpa [#allocation6], 1

</llo_original>
